<compile_context>
chip_gen: v5e
topology: v5e:2x2
jax: 0.10.0
libtpu: 0.0.40
codegen_flags: <defaults>
</compile_context>

<pallas_src>
import functools

import jax
import jax.numpy as jnp
from jax import lax
from jax.experimental import pallas as pl
from jax.experimental.pallas import tpu as pltpu


def _round_up(n, m):
    return ((n + m - 1) // m) * m


def _basic_block_kernel(x_ref, w1_ref, s1_ref, b1_ref, w2_ref, s2_ref, b2_ref,
                        out_ref, stack_ref, *, H, W, Lt, Cin_p, Cout_p,
                        need_pool):
    """One grid step = `ipt` whole images.  Layout: (channels, img*H*W)."""
    f32 = jnp.float32
    bf16 = jnp.bfloat16
    HW = H * W

    # Per-lane (h, w) position inside its image.  Tiles hold whole images, so
    # lane = img*H*W + h*W + w.  Built from a lane iota with float multiply /
    # floor only (cheap VPU work, no DMA'd mask constants).
    lane = lax.broadcasted_iota(jnp.int32, (1, Lt), 1).astype(f32)
    img = jnp.floor((lane + 0.5) * (1.0 / HW))
    local = lane - img * HW
    hh = jnp.floor((local + 0.5) * (1.0 / W))
    ww = local - hh * W

    def build_stack(a, c_p):
        """Write the 9 rolled+masked taps of `a` (c_p, Lt) into stack_ref and
        return the (9*c_p, Lt) stack cast to bf16 for the MXU."""
        t = 0
        for dy in (-1, 0, 1):
            for dx in (-1, 0, 1):
                s = dy * W + dx
                v = a if s == 0 else pltpu.roll(a, (-s) % Lt, 1)
                ok = None
                if dy < 0:
                    ok = hh >= float(-dy)
                elif dy > 0:
                    ok = hh < float(H - dy)
                if dx < 0:
                    c = ww >= float(-dx)
                    ok = c if ok is None else ok & c
                elif dx > 0:
                    c = ww < float(W - dx)
                    ok = c if ok is None else ok & c
                if ok is not None:                 # center tap needs no mask
                    v = jnp.where(ok, v, 0.0)
                stack_ref[t * c_p:(t + 1) * c_p, :] = v
                t += 1
        return stack_ref[0:9 * c_p, :].astype(bf16)

    x = x_ref[...]                                          # (Cin_p, Lt) f32

    # conv1 (3x3) with the 1x1 shortcut fused into extra M rows, then BN.
    y = jnp.dot(w1_ref[...], build_stack(x, Cin_p),
                preferred_element_type=f32)                 # (R1, Lt)
    y = y * s1_ref[...] + b1_ref[...]
    out1 = jnp.maximum(y[0:Cout_p, :], 0.0)                 # conv1->bn1->relu
    if need_pool:
        ident = y[Cout_p:2 * Cout_p, :]                     # 1x1 conv -> bnd
    else:
        ident = x                                           # Cin_p == Cout_p

    # conv2 (3x3) -> bn2
    out2 = jnp.dot(w2_ref[...], build_stack(out1, Cout_p),
                   preferred_element_type=f32)
    out2 = out2 * s2_ref[...] + b2_ref[...]

    out = jnp.maximum(out2 + ident, 0.0)                    # residual + relu

    if need_pool:
        # MaxPool2d(2): max over the 2x2 window taps.  Lane compaction (keep
        # even (h, w) only) is a strided slice in the jitted wrapper -- keeps
        # the store lane-dense and removes the old (L, L/4) selection matmul
        # and its DMA'd constant entirely.
        m = jnp.maximum(out, pltpu.roll(out, Lt - 1, 1))
        m = jnp.maximum(m, pltpu.roll(out, Lt - W, 1))
        out = jnp.maximum(m, pltpu.roll(out, Lt - W - 1, 1))

    out_ref[...] = out.astype(out_ref.dtype)


def basic_block_forward(x_nchw, params, *, need_pool=True):
    """Forward pass of BasicBlock (BN in eval mode, stats folded to scale/bias)."""
    # TODO(synk): training-mode BatchNorm (batch statistics + running-stat
    # updates) is not implemented; eval-mode running-stats semantics are used.
    N, Cin, H, W = x_nchw.shape
    Cout = params["w1"].shape[0]
    eps = 1e-5
    HW = H * W
    f32, bf16 = jnp.float32, jnp.bfloat16

    Cin_p, Cout_p = _round_up(Cin, 8), _round_up(Cout, 8)
    if need_pool:
        assert H % 2 == 0 and W % 2 == 0, "MaxPool2d(2) needs even H, W"
    else:
        assert Cin == Cout, "identity shortcut needs Cin == Cout"

    # Lane-axis tiling: whole images per grid step (roll+mask stays image-
    # local), targeting ~512 lanes/step; grid axis is "parallel" (megacore).
    ipt = min(N, max(1, 512 // HW))
    while N % ipt:
        ipt -= 1
    num_tiles = N // ipt
    Lt = ipt * HW

    # Activations: channels on sublanes, flattened (n, h, w) on lanes.
    xr = jnp.transpose(x_nchw, (1, 0, 2, 3)).reshape(Cin, N * HW).astype(f32)
    xr = jnp.pad(xr, ((0, Cin_p - Cin), (0, 0)))

    # Fold conv bias + eval-mode BN into per-channel (scale, bias).
    def fold(gamma, beta, mean, var, conv_bias):
        s = gamma / jnp.sqrt(var + eps)
        b = (conv_bias - mean) * s + beta
        s = jnp.pad(s.astype(f32), (0, Cout_p - Cout)).reshape(Cout_p, 1)
        b = jnp.pad(b.astype(f32), (0, Cout_p - Cout)).reshape(Cout_p, 1)
        return s, b

    s1, b1 = fold(params["bn1_gamma"], params["bn1_beta"],
                  params["bn1_mean"], params["bn1_var"], params["b1"])
    s2, b2 = fold(params["bn2_gamma"], params["bn2_beta"],
                  params["bn2_mean"], params["bn2_var"], params["b2"])

    # 3x3 conv weights in single-matmul (M, K=(tap, cin)) form.
    def conv3x3_weight(w, cin, cin_p):
        w = jnp.pad(w.astype(f32),
                    ((0, Cout_p - Cout), (0, cin_p - cin), (0, 0), (0, 0)))
        return jnp.transpose(w, (0, 2, 3, 1)).reshape(Cout_p, 9 * cin_p)

    w1r = conv3x3_weight(params["w1"], Cin, Cin_p)       # (Cout_p, 9*Cin_p)
    w2r = conv3x3_weight(params["w2"], Cout, Cout_p)     # (Cout_p, 9*Cout_p)

    if need_pool:
        # Fuse the 1x1-conv shortcut into conv1's matmul: its weights live in
        # the center-tap (t=4) Cin columns of an extra Cout_p rows.
        sd, bd = fold(params["bnd_gamma"], params["bnd_beta"],
                      params["bnd_mean"], params["bnd_var"], params["bd"])
        wd = jnp.pad(params["wd"].astype(f32).reshape(Cout, Cin),
                     ((0, Cout_p - Cout), (0, Cin_p - Cin)))
        wd_rows = jnp.zeros((Cout_p, 9 * Cin_p), f32)
        wd_rows = wd_rows.at[:, 4 * Cin_p:5 * Cin_p].set(wd)
        w1f = jnp.concatenate([w1r, wd_rows], axis=0)    # (2*Cout_p, 9*Cin_p)
        s1f = jnp.concatenate([s1, sd], axis=0)
        b1f = jnp.concatenate([b1, bd], axis=0)
    else:
        w1f, s1f, b1f = w1r, s1, b1

    # bf16 matmul operands (MXU-native on v5e/v6e/v7x); accumulation and all
    # VPU work stay in f32.
    w1f = w1f.astype(bf16)
    w2b = w2r.astype(bf16)

    Cp_max = max(Cin_p, Cout_p)
    kernel = functools.partial(_basic_block_kernel, H=H, W=W, Lt=Lt,
                               Cin_p=Cin_p, Cout_p=Cout_p, need_pool=need_pool)

    flops = 2 * N * HW * (w1f.shape[0] * w1f.shape[1]
                          + w2b.shape[0] * w2b.shape[1])
    bytes_accessed = (xr.size * 4 + w1f.size * 2 + w2b.size * 2
                      + (s1f.size + b1f.size + s2.size + b2.size) * 4
                      + Cout_p * N * HW * 4)

    out_flat = pl.pallas_call(
        kernel,
        out_shape=jax.ShapeDtypeStruct((Cout_p, N * HW), f32),
        grid=(num_tiles,),
        in_specs=[
            pl.BlockSpec((Cin_p, Lt), lambda i: (0, i)),
            pl.BlockSpec(w1f.shape, lambda i: (0, 0)),
            pl.BlockSpec(s1f.shape, lambda i: (0, 0)),
            pl.BlockSpec(b1f.shape, lambda i: (0, 0)),
            pl.BlockSpec(w2b.shape, lambda i: (0, 0)),
            pl.BlockSpec(s2.shape, lambda i: (0, 0)),
            pl.BlockSpec(b2.shape, lambda i: (0, 0)),
        ],
        out_specs=pl.BlockSpec((Cout_p, Lt), lambda i: (0, i)),
        scratch_shapes=[pltpu.VMEM((9 * Cp_max, Lt), f32)],
        compiler_params=pltpu.CompilerParams(
            dimension_semantics=("parallel",)),
        cost_estimate=pl.CostEstimate(flops=int(flops), transcendentals=0,
                                      bytes_accessed=int(bytes_accessed)),
    )(xr, w1f, s1f, b1f, w2b, s2, b2)

    # (Cout_p, N*H*W) -> NCHW; the MaxPool lane selection is a strided slice
    # here (pure layout plumbing under jit).
    out = out_flat[:Cout].reshape(Cout, N, H, W)
    if need_pool:
        out = out[:, :, ::2, ::2]
    return jnp.transpose(out, (1, 0, 2, 3))


def reference_forward(x, p, *, need_pool=True):
    """Pure-JAX NCHW reference matching the PyTorch forward (BN in eval mode)."""
    eps = 1e-5

    def conv(x, w, b, pad):
        y = lax.conv_general_dilated(x, w, (1, 1), [(pad, pad), (pad, pad)],
                                     dimension_numbers=("NCHW", "OIHW", "NCHW"))
        return y + b.reshape(1, -1, 1, 1)

    def bn(x, g, be, m, v):
        return ((x - m.reshape(1, -1, 1, 1)) /
                jnp.sqrt(v.reshape(1, -1, 1, 1) + eps)) * g.reshape(1, -1, 1, 1) \
               + be.reshape(1, -1, 1, 1)

    out = conv(x, p["w1"], p["b1"], 1)
    out = jnp.maximum(bn(out, p["bn1_gamma"], p["bn1_beta"],
                         p["bn1_mean"], p["bn1_var"]), 0.0)
    out = conv(out, p["w2"], p["b2"], 1)
    out = bn(out, p["bn2_gamma"], p["bn2_beta"], p["bn2_mean"], p["bn2_var"])
    if need_pool:
        ident = conv(x, p["wd"], p["bd"], 0)
        ident = bn(ident, p["bnd_gamma"], p["bnd_beta"],
                   p["bnd_mean"], p["bnd_var"])
    else:
        ident = x
    out = jnp.maximum(out + ident, 0.0)
    if need_pool:
        out = lax.reduce_window(out, -jnp.inf, lax.max,
                                (1, 1, 2, 2), (1, 1, 2, 2), "VALID")
    return out


def init_params(key, inplanes, outplanes, k=3):
    keys = jax.random.split(key, 16)
    n = lambda i, shape, scale=0.1: jax.random.normal(keys[i], shape, jnp.float32) * scale
    return {
        "w1": n(0, (outplanes, inplanes, k, k)),
        "b1": n(1, (outplanes,)),
        "w2": n(2, (outplanes, outplanes, k, k)),
        "b2": n(3, (outplanes,)),
        "wd": n(4, (outplanes, inplanes, 1, 1)),
        "bd": n(5, (outplanes,)),
        "bn1_gamma": 1.0 + n(6, (outplanes,)),
        "bn1_beta": n(7, (outplanes,)),
        "bn1_mean": n(8, (outplanes,)),
        "bn1_var": 1.0 + 0.1 * jax.random.uniform(keys[9], (outplanes,), jnp.float32),
        "bn2_gamma": 1.0 + n(10, (outplanes,)),
        "bn2_beta": n(11, (outplanes,)),
        "bn2_mean": n(12, (outplanes,)),
        "bn2_var": 1.0 + 0.1 * jax.random.uniform(keys[13], (outplanes,), jnp.float32),
        "bnd_gamma": 1.0 + n(14, (outplanes,)),
        "bnd_beta": n(15, (outplanes,)),
        "bnd_mean": jnp.zeros((outplanes,), jnp.float32),
        "bnd_var": jnp.ones((outplanes,), jnp.float32),
    }


if __name__ == "__main__":
    # BasicBlock(inplanes=4, outplanes=8, kernel_size=3, need_pool=True)
    # N=4 so the lane axis tiles into grid=(2,) "parallel" steps of 2 images.
    N, Cin, H, W = 4, 4, 16, 16
    Cout = 8

    key = jax.random.PRNGKey(0)
    k_x, k_p = jax.random.split(key)
    x = jax.random.normal(k_x, (N, Cin, H, W), jnp.float32)
    params = init_params(k_p, Cin, Cout, 3)

    fwd = jax.jit(basic_block_forward, static_argnames=("need_pool",))
    out = jax.block_until_ready(fwd(x, params, need_pool=True))

    ref = jax.block_until_ready(reference_forward(x, params, need_pool=True))

    assert out.shape == (N, Cout, H // 2, W // 2), out.shape
    # bf16 matmul operands vs. f32 reference -> relaxed tolerance (per review).
    max_err = float(jnp.max(jnp.abs(out - ref)))
    assert jnp.allclose(out, ref, atol=8e-2, rtol=5e-2), max_err

    print("KERNEL_OK")
</pallas_src>

<mosaic_0001>
module attributes {stable_mosaic.version = 11 : i64} {
  func.func @_basic_block_kernel(%arg0: i32, %arg1: memref<8x512xf32, #tpu.memory_space<vmem>>, %arg2: memref<16x72xbf16, #tpu.memory_space<vmem>>, %arg3: memref<16x1xf32, #tpu.memory_space<vmem>>, %arg4: memref<16x1xf32, #tpu.memory_space<vmem>>, %arg5: memref<8x72xbf16, #tpu.memory_space<vmem>>, %arg6: memref<8x1xf32, #tpu.memory_space<vmem>>, %arg7: memref<8x1xf32, #tpu.memory_space<vmem>>, %arg8: memref<8x512xf32, #tpu.memory_space<vmem>>, %arg9: memref<72x512xf32, #tpu.memory_space<vmem>>) attributes {dimension_semantics = [#tpu.dimension_semantics<parallel>], iteration_bounds = array<i64: 2>, scalar_prefetch = 0 : i64, scratch_operands = 1 : i64, tpu.core_type = #tpu.core_type<tc>, window_params = [{transform_indices = @transform_0, window_bounds = array<i64: 8, 512>}, {pipeline_mode = #tpu.pipeline_mode<synchronous>, transform_indices = @transform_1, window_bounds = array<i64: 16, 72>}, {pipeline_mode = #tpu.pipeline_mode<synchronous>, transform_indices = @transform_2, window_bounds = array<i64: 16, 1>}, {pipeline_mode = #tpu.pipeline_mode<synchronous>, transform_indices = @transform_3, window_bounds = array<i64: 16, 1>}, {pipeline_mode = #tpu.pipeline_mode<synchronous>, transform_indices = @transform_4, window_bounds = array<i64: 8, 72>}, {pipeline_mode = #tpu.pipeline_mode<synchronous>, transform_indices = @transform_5, window_bounds = array<i64: 8, 1>}, {pipeline_mode = #tpu.pipeline_mode<synchronous>, transform_indices = @transform_6, window_bounds = array<i64: 8, 1>}, {transform_indices = @transform_7, window_bounds = array<i64: 8, 512>}]} {
    %0 = tpu.iota {dimensions = array<i32: 1>} : vector<1x512xi32>
    %1 = arith.sitofp %0 : vector<1x512xi32> to vector<1x512xf32>
    %cst = arith.constant 5.000000e-01 : f32
    %2 = vector.broadcast %cst : f32 to vector<1x512xf32>
    %3 = arith.addf %1, %2 : vector<1x512xf32>
    %cst_0 = arith.constant 3.906250e-03 : f32
    %4 = vector.broadcast %cst_0 : f32 to vector<1x512xf32>
    %5 = arith.mulf %3, %4 : vector<1x512xf32>
    %6 = math.floor %5 : vector<1x512xf32>
    %cst_1 = arith.constant 2.560000e+02 : f32
    %7 = vector.broadcast %cst_1 : f32 to vector<1x512xf32>
    %8 = arith.mulf %6, %7 : vector<1x512xf32>
    %9 = arith.subf %1, %8 : vector<1x512xf32>
    %cst_2 = arith.constant 5.000000e-01 : f32
    %10 = vector.broadcast %cst_2 : f32 to vector<1x512xf32>
    %11 = arith.addf %9, %10 : vector<1x512xf32>
    %cst_3 = arith.constant 6.250000e-02 : f32
    %12 = vector.broadcast %cst_3 : f32 to vector<1x512xf32>
    %13 = arith.mulf %11, %12 : vector<1x512xf32>
    %14 = math.floor %13 : vector<1x512xf32>
    %cst_4 = arith.constant 1.600000e+01 : f32
    %15 = vector.broadcast %cst_4 : f32 to vector<1x512xf32>
    %16 = arith.mulf %14, %15 : vector<1x512xf32>
    %17 = arith.subf %9, %16 : vector<1x512xf32>
    %c0 = arith.constant 0 : index
    %c0_5 = arith.constant 0 : index
    %18 = vector.load %arg1[%c0, %c0_5] : memref<8x512xf32, #tpu.memory_space<vmem>>, vector<8x512xf32>
    %c0_6 = arith.constant 0 : index
    %c0_7 = arith.constant 0 : index
    %19 = vector.load %arg2[%c0_6, %c0_7] : memref<16x72xbf16, #tpu.memory_space<vmem>>, vector<16x72xbf16>
    %c17_i32 = arith.constant 17 : i32
    %20 = tpu.dynamic_rotate %18 by %c17_i32 dim 1 : vector<8x512xf32>, i32 -> vector<8x512xf32>
    %cst_8 = arith.constant 1.000000e+00 : f32
    %21 = vector.broadcast %cst_8 : f32 to vector<1x512xf32>
    %22 = arith.cmpf oge, %14, %21 : vector<1x512xf32>
    %cst_9 = arith.constant 1.000000e+00 : f32
    %23 = vector.broadcast %cst_9 : f32 to vector<1x512xf32>
    %24 = arith.cmpf oge, %17, %23 : vector<1x512xf32>
    %25 = arith.andi %22, %24 : vector<1x512xi1>
    %cst_10 = arith.constant 0.000000e+00 : f32
    %26 = vector.shape_cast %25 : vector<1x512xi1> to vector<1x512xi1>
    %27 = vector.broadcast %26 : vector<1x512xi1> to vector<8x512xi1>
    %28 = vector.broadcast %cst_10 : f32 to vector<8x512xf32>
    %29 = arith.select %27, %20, %28 : vector<8x512xi1>, vector<8x512xf32>
    %c0_11 = arith.constant 0 : index
    %c0_12 = arith.constant 0 : index
    %30 = vector.load %arg9[%c0_11, %c0_12] : memref<72x512xf32, #tpu.memory_space<vmem>>, vector<8x512xf32>
    tpu.vector_store %arg9[%c0_11, %c0_12], %29 {strides = array<i32>} : memref<72x512xf32, #tpu.memory_space<vmem>>, vector<8x512xf32>,
    %c16_i32 = arith.constant 16 : i32
    %31 = tpu.dynamic_rotate %18 by %c16_i32 dim 1 : vector<8x512xf32>, i32 -> vector<8x512xf32>
    %cst_13 = arith.constant 1.000000e+00 : f32
    %32 = vector.broadcast %cst_13 : f32 to vector<1x512xf32>
    %33 = arith.cmpf oge, %14, %32 : vector<1x512xf32>
    %cst_14 = arith.constant 0.000000e+00 : f32
    %34 = vector.shape_cast %33 : vector<1x512xi1> to vector<1x512xi1>
    %35 = vector.broadcast %34 : vector<1x512xi1> to vector<8x512xi1>
    %36 = vector.broadcast %cst_14 : f32 to vector<8x512xf32>
    %37 = arith.select %35, %31, %36 : vector<8x512xi1>, vector<8x512xf32>
    %c8 = arith.constant 8 : index
    %c0_15 = arith.constant 0 : index
    %38 = vector.load %arg9[%c8, %c0_15] : memref<72x512xf32, #tpu.memory_space<vmem>>, vector<8x512xf32>
    tpu.vector_store %arg9[%c8, %c0_15], %37 {strides = array<i32>} : memref<72x512xf32, #tpu.memory_space<vmem>>, vector<8x512xf32>,
    %c15_i32 = arith.constant 15 : i32
    %39 = tpu.dynamic_rotate %18 by %c15_i32 dim 1 : vector<8x512xf32>, i32 -> vector<8x512xf32>
    %cst_16 = arith.constant 1.000000e+00 : f32
    %40 = vector.broadcast %cst_16 : f32 to vector<1x512xf32>
    %41 = arith.cmpf oge, %14, %40 : vector<1x512xf32>
    %cst_17 = arith.constant 1.500000e+01 : f32
    %42 = vector.broadcast %cst_17 : f32 to vector<1x512xf32>
    %43 = arith.cmpf olt, %17, %42 : vector<1x512xf32>
    %44 = arith.andi %41, %43 : vector<1x512xi1>
    %cst_18 = arith.constant 0.000000e+00 : f32
    %45 = vector.shape_cast %44 : vector<1x512xi1> to vector<1x512xi1>
    %46 = vector.broadcast %45 : vector<1x512xi1> to vector<8x512xi1>
    %47 = vector.broadcast %cst_18 : f32 to vector<8x512xf32>
    %48 = arith.select %46, %39, %47 : vector<8x512xi1>, vector<8x512xf32>
    %c16 = arith.constant 16 : index
    %c0_19 = arith.constant 0 : index
    %49 = vector.load %arg9[%c16, %c0_19] : memref<72x512xf32, #tpu.memory_space<vmem>>, vector<8x512xf32>
    tpu.vector_store %arg9[%c16, %c0_19], %48 {strides = array<i32>} : memref<72x512xf32, #tpu.memory_space<vmem>>, vector<8x512xf32>,
    %c1_i32 = arith.constant 1 : i32
    %50 = tpu.dynamic_rotate %18 by %c1_i32 dim 1 : vector<8x512xf32>, i32 -> vector<8x512xf32>
    %cst_20 = arith.constant 1.000000e+00 : f32
    %51 = vector.broadcast %cst_20 : f32 to vector<1x512xf32>
    %52 = arith.cmpf oge, %17, %51 : vector<1x512xf32>
    %cst_21 = arith.constant 0.000000e+00 : f32
    %53 = vector.shape_cast %52 : vector<1x512xi1> to vector<1x512xi1>
    %54 = vector.broadcast %53 : vector<1x512xi1> to vector<8x512xi1>
    %55 = vector.broadcast %cst_21 : f32 to vector<8x512xf32>
    %56 = arith.select %54, %50, %55 : vector<8x512xi1>, vector<8x512xf32>
    %c24 = arith.constant 24 : index
    %c0_22 = arith.constant 0 : index
    %57 = vector.load %arg9[%c24, %c0_22] : memref<72x512xf32, #tpu.memory_space<vmem>>, vector<8x512xf32>
    tpu.vector_store %arg9[%c24, %c0_22], %56 {strides = array<i32>} : memref<72x512xf32, #tpu.memory_space<vmem>>, vector<8x512xf32>,
    %c32 = arith.constant 32 : index
    %c0_23 = arith.constant 0 : index
    %58 = vector.load %arg9[%c32, %c0_23] : memref<72x512xf32, #tpu.memory_space<vmem>>, vector<8x512xf32>
    tpu.vector_store %arg9[%c32, %c0_23], %18 {strides = array<i32>} : memref<72x512xf32, #tpu.memory_space<vmem>>, vector<8x512xf32>,
    %c511_i32 = arith.constant 511 : i32
    %59 = tpu.dynamic_rotate %18 by %c511_i32 dim 1 : vector<8x512xf32>, i32 -> vector<8x512xf32>
    %cst_24 = arith.constant 1.500000e+01 : f32
    %60 = vector.broadcast %cst_24 : f32 to vector<1x512xf32>
    %61 = arith.cmpf olt, %17, %60 : vector<1x512xf32>
    %cst_25 = arith.constant 0.000000e+00 : f32
    %62 = vector.shape_cast %61 : vector<1x512xi1> to vector<1x512xi1>
    %63 = vector.broadcast %62 : vector<1x512xi1> to vector<8x512xi1>
    %64 = vector.broadcast %cst_25 : f32 to vector<8x512xf32>
    %65 = arith.select %63, %59, %64 : vector<8x512xi1>, vector<8x512xf32>
    %c40 = arith.constant 40 : index
    %c0_26 = arith.constant 0 : index
    %66 = vector.load %arg9[%c40, %c0_26] : memref<72x512xf32, #tpu.memory_space<vmem>>, vector<8x512xf32>
    tpu.vector_store %arg9[%c40, %c0_26], %65 {strides = array<i32>} : memref<72x512xf32, #tpu.memory_space<vmem>>, vector<8x512xf32>,
    %c497_i32 = arith.constant 497 : i32
    %67 = tpu.dynamic_rotate %18 by %c497_i32 dim 1 : vector<8x512xf32>, i32 -> vector<8x512xf32>
    %cst_27 = arith.constant 1.500000e+01 : f32
    %68 = vector.broadcast %cst_27 : f32 to vector<1x512xf32>
    %69 = arith.cmpf olt, %14, %68 : vector<1x512xf32>
    %cst_28 = arith.constant 1.000000e+00 : f32
    %70 = vector.broadcast %cst_28 : f32 to vector<1x512xf32>
    %71 = arith.cmpf oge, %17, %70 : vector<1x512xf32>
    %72 = arith.andi %69, %71 : vector<1x512xi1>
    %cst_29 = arith.constant 0.000000e+00 : f32
    %73 = vector.shape_cast %72 : vector<1x512xi1> to vector<1x512xi1>
    %74 = vector.broadcast %73 : vector<1x512xi1> to vector<8x512xi1>
    %75 = vector.broadcast %cst_29 : f32 to vector<8x512xf32>
    %76 = arith.select %74, %67, %75 : vector<8x512xi1>, vector<8x512xf32>
    %c48 = arith.constant 48 : index
    %c0_30 = arith.constant 0 : index
    %77 = vector.load %arg9[%c48, %c0_30] : memref<72x512xf32, #tpu.memory_space<vmem>>, vector<8x512xf32>
    tpu.vector_store %arg9[%c48, %c0_30], %76 {strides = array<i32>} : memref<72x512xf32, #tpu.memory_space<vmem>>, vector<8x512xf32>,
    %c496_i32 = arith.constant 496 : i32
    %78 = tpu.dynamic_rotate %18 by %c496_i32 dim 1 : vector<8x512xf32>, i32 -> vector<8x512xf32>
    %cst_31 = arith.constant 1.500000e+01 : f32
    %79 = vector.broadcast %cst_31 : f32 to vector<1x512xf32>
    %80 = arith.cmpf olt, %14, %79 : vector<1x512xf32>
    %cst_32 = arith.constant 0.000000e+00 : f32
    %81 = vector.shape_cast %80 : vector<1x512xi1> to vector<1x512xi1>
    %82 = vector.broadcast %81 : vector<1x512xi1> to vector<8x512xi1>
    %83 = vector.broadcast %cst_32 : f32 to vector<8x512xf32>
    %84 = arith.select %82, %78, %83 : vector<8x512xi1>, vector<8x512xf32>
    %c56 = arith.constant 56 : index
    %c0_33 = arith.constant 0 : index
    %85 = vector.load %arg9[%c56, %c0_33] : memref<72x512xf32, #tpu.memory_space<vmem>>, vector<8x512xf32>
    tpu.vector_store %arg9[%c56, %c0_33], %84 {strides = array<i32>} : memref<72x512xf32, #tpu.memory_space<vmem>>, vector<8x512xf32>,
    %c495_i32 = arith.constant 495 : i32
    %86 = tpu.dynamic_rotate %18 by %c495_i32 dim 1 : vector<8x512xf32>, i32 -> vector<8x512xf32>
    %cst_34 = arith.constant 1.500000e+01 : f32
    %87 = vector.broadcast %cst_34 : f32 to vector<1x512xf32>
    %88 = arith.cmpf olt, %14, %87 : vector<1x512xf32>
    %cst_35 = arith.constant 1.500000e+01 : f32
    %89 = vector.broadcast %cst_35 : f32 to vector<1x512xf32>
    %90 = arith.cmpf olt, %17, %89 : vector<1x512xf32>
    %91 = arith.andi %88, %90 : vector<1x512xi1>
    %cst_36 = arith.constant 0.000000e+00 : f32
    %92 = vector.shape_cast %91 : vector<1x512xi1> to vector<1x512xi1>
    %93 = vector.broadcast %92 : vector<1x512xi1> to vector<8x512xi1>
    %94 = vector.broadcast %cst_36 : f32 to vector<8x512xf32>
    %95 = arith.select %93, %86, %94 : vector<8x512xi1>, vector<8x512xf32>
    %c64 = arith.constant 64 : index
    %c0_37 = arith.constant 0 : index
    %96 = vector.load %arg9[%c64, %c0_37] : memref<72x512xf32, #tpu.memory_space<vmem>>, vector<8x512xf32>
    tpu.vector_store %arg9[%c64, %c0_37], %95 {strides = array<i32>} : memref<72x512xf32, #tpu.memory_space<vmem>>, vector<8x512xf32>,
    %c0_38 = arith.constant 0 : index
    %c0_39 = arith.constant 0 : index
    %97 = vector.load %arg9[%c0_38, %c0_39] : memref<72x512xf32, #tpu.memory_space<vmem>>, vector<72x512xf32>
    %98 = arith.truncf %97 : vector<72x512xf32> to vector<72x512xbf16>
    %cst_40 = arith.constant dense<0.000000e+00> : vector<16x512xf32>
    %99 = tpu.matmul %19, %98, %cst_40 {dimension_numbers = #tpu.dot_dimension_numbers<[1], [0], [0], [1], [0, 0, 1, 1], [], []>} : vector<16x72xbf16>, vector<72x512xbf16>, vector<16x512xf32> -> vector<16x512xf32>
    %c0_41 = arith.constant 0 : index
    %c0_42 = arith.constant 0 : index
    %100 = vector.load %arg3[%c0_41, %c0_42] : memref<16x1xf32, #tpu.memory_space<vmem>>, vector<16x1xf32>
    %101 = vector.broadcast %100 : vector<16x1xf32> to vector<16x512xf32>
    %102 = arith.mulf %99, %101 : vector<16x512xf32>
    %c0_43 = arith.constant 0 : index
    %c0_44 = arith.constant 0 : index
    %103 = vector.load %arg4[%c0_43, %c0_44] : memref<16x1xf32, #tpu.memory_space<vmem>>, vector<16x1xf32>
    %104 = vector.broadcast %103 : vector<16x1xf32> to vector<16x512xf32>
    %105 = arith.addf %102, %104 : vector<16x512xf32>
    %106 = vector.extract_strided_slice %105 {offsets = [0, 0], sizes = [8, 512], strides = [1, 1]} : vector<16x512xf32> to vector<8x512xf32>
    %cst_45 = arith.constant 0.000000e+00 : f32
    %107 = vector.broadcast %cst_45 : f32 to vector<8x512xf32>
    %108 = arith.maximumf %106, %107 : vector<8x512xf32>
    %109 = vector.extract_strided_slice %105 {offsets = [8, 0], sizes = [8, 512], strides = [1, 1]} : vector<16x512xf32> to vector<8x512xf32>
    %c0_46 = arith.constant 0 : index
    %c0_47 = arith.constant 0 : index
    %110 = vector.load %arg5[%c0_46, %c0_47] : memref<8x72xbf16, #tpu.memory_space<vmem>>, vector<8x72xbf16>
    %c17_i32_48 = arith.constant 17 : i32
    %111 = tpu.dynamic_rotate %108 by %c17_i32_48 dim 1 : vector<8x512xf32>, i32 -> vector<8x512xf32>
    %cst_49 = arith.constant 1.000000e+00 : f32
    %112 = vector.broadcast %cst_49 : f32 to vector<1x512xf32>
    %113 = arith.cmpf oge, %14, %112 : vector<1x512xf32>
    %cst_50 = arith.constant 1.000000e+00 : f32
    %114 = vector.broadcast %cst_50 : f32 to vector<1x512xf32>
    %115 = arith.cmpf oge, %17, %114 : vector<1x512xf32>
    %116 = arith.andi %113, %115 : vector<1x512xi1>
    %cst_51 = arith.constant 0.000000e+00 : f32
    %117 = vector.shape_cast %116 : vector<1x512xi1> to vector<1x512xi1>
    %118 = vector.broadcast %117 : vector<1x512xi1> to vector<8x512xi1>
    %119 = vector.broadcast %cst_51 : f32 to vector<8x512xf32>
    %120 = arith.select %118, %111, %119 : vector<8x512xi1>, vector<8x512xf32>
    %c0_52 = arith.constant 0 : index
    %c0_53 = arith.constant 0 : index
    %121 = vector.load %arg9[%c0_52, %c0_53] : memref<72x512xf32, #tpu.memory_space<vmem>>, vector<8x512xf32>
    tpu.vector_store %arg9[%c0_52, %c0_53], %120 {strides = array<i32>} : memref<72x512xf32, #tpu.memory_space<vmem>>, vector<8x512xf32>,
    %c16_i32_54 = arith.constant 16 : i32
    %122 = tpu.dynamic_rotate %108 by %c16_i32_54 dim 1 : vector<8x512xf32>, i32 -> vector<8x512xf32>
    %cst_55 = arith.constant 1.000000e+00 : f32
    %123 = vector.broadcast %cst_55 : f32 to vector<1x512xf32>
    %124 = arith.cmpf oge, %14, %123 : vector<1x512xf32>
    %cst_56 = arith.constant 0.000000e+00 : f32
    %125 = vector.shape_cast %124 : vector<1x512xi1> to vector<1x512xi1>
    %126 = vector.broadcast %125 : vector<1x512xi1> to vector<8x512xi1>
    %127 = vector.broadcast %cst_56 : f32 to vector<8x512xf32>
    %128 = arith.select %126, %122, %127 : vector<8x512xi1>, vector<8x512xf32>
    %c8_57 = arith.constant 8 : index
    %c0_58 = arith.constant 0 : index
    %129 = vector.load %arg9[%c8_57, %c0_58] : memref<72x512xf32, #tpu.memory_space<vmem>>, vector<8x512xf32>
    tpu.vector_store %arg9[%c8_57, %c0_58], %128 {strides = array<i32>} : memref<72x512xf32, #tpu.memory_space<vmem>>, vector<8x512xf32>,
    %c15_i32_59 = arith.constant 15 : i32
    %130 = tpu.dynamic_rotate %108 by %c15_i32_59 dim 1 : vector<8x512xf32>, i32 -> vector<8x512xf32>
    %cst_60 = arith.constant 1.000000e+00 : f32
    %131 = vector.broadcast %cst_60 : f32 to vector<1x512xf32>
    %132 = arith.cmpf oge, %14, %131 : vector<1x512xf32>
    %cst_61 = arith.constant 1.500000e+01 : f32
    %133 = vector.broadcast %cst_61 : f32 to vector<1x512xf32>
    %134 = arith.cmpf olt, %17, %133 : vector<1x512xf32>
    %135 = arith.andi %132, %134 : vector<1x512xi1>
    %cst_62 = arith.constant 0.000000e+00 : f32
    %136 = vector.shape_cast %135 : vector<1x512xi1> to vector<1x512xi1>
    %137 = vector.broadcast %136 : vector<1x512xi1> to vector<8x512xi1>
    %138 = vector.broadcast %cst_62 : f32 to vector<8x512xf32>
    %139 = arith.select %137, %130, %138 : vector<8x512xi1>, vector<8x512xf32>
    %c16_63 = arith.constant 16 : index
    %c0_64 = arith.constant 0 : index
    %140 = vector.load %arg9[%c16_63, %c0_64] : memref<72x512xf32, #tpu.memory_space<vmem>>, vector<8x512xf32>
    tpu.vector_store %arg9[%c16_63, %c0_64], %139 {strides = array<i32>} : memref<72x512xf32, #tpu.memory_space<vmem>>, vector<8x512xf32>,
    %c1_i32_65 = arith.constant 1 : i32
    %141 = tpu.dynamic_rotate %108 by %c1_i32_65 dim 1 : vector<8x512xf32>, i32 -> vector<8x512xf32>
    %cst_66 = arith.constant 1.000000e+00 : f32
    %142 = vector.broadcast %cst_66 : f32 to vector<1x512xf32>
    %143 = arith.cmpf oge, %17, %142 : vector<1x512xf32>
    %cst_67 = arith.constant 0.000000e+00 : f32
    %144 = vector.shape_cast %143 : vector<1x512xi1> to vector<1x512xi1>
    %145 = vector.broadcast %144 : vector<1x512xi1> to vector<8x512xi1>
    %146 = vector.broadcast %cst_67 : f32 to vector<8x512xf32>
    %147 = arith.select %145, %141, %146 : vector<8x512xi1>, vector<8x512xf32>
    %c24_68 = arith.constant 24 : index
    %c0_69 = arith.constant 0 : index
    %148 = vector.load %arg9[%c24_68, %c0_69] : memref<72x512xf32, #tpu.memory_space<vmem>>, vector<8x512xf32>
    tpu.vector_store %arg9[%c24_68, %c0_69], %147 {strides = array<i32>} : memref<72x512xf32, #tpu.memory_space<vmem>>, vector<8x512xf32>,
    %c32_70 = arith.constant 32 : index
    %c0_71 = arith.constant 0 : index
    %149 = vector.load %arg9[%c32_70, %c0_71] : memref<72x512xf32, #tpu.memory_space<vmem>>, vector<8x512xf32>
    tpu.vector_store %arg9[%c32_70, %c0_71], %108 {strides = array<i32>} : memref<72x512xf32, #tpu.memory_space<vmem>>, vector<8x512xf32>,
    %c511_i32_72 = arith.constant 511 : i32
    %150 = tpu.dynamic_rotate %108 by %c511_i32_72 dim 1 : vector<8x512xf32>, i32 -> vector<8x512xf32>
    %cst_73 = arith.constant 1.500000e+01 : f32
    %151 = vector.broadcast %cst_73 : f32 to vector<1x512xf32>
    %152 = arith.cmpf olt, %17, %151 : vector<1x512xf32>
    %cst_74 = arith.constant 0.000000e+00 : f32
    %153 = vector.shape_cast %152 : vector<1x512xi1> to vector<1x512xi1>
    %154 = vector.broadcast %153 : vector<1x512xi1> to vector<8x512xi1>
    %155 = vector.broadcast %cst_74 : f32 to vector<8x512xf32>
    %156 = arith.select %154, %150, %155 : vector<8x512xi1>, vector<8x512xf32>
    %c40_75 = arith.constant 40 : index
    %c0_76 = arith.constant 0 : index
    %157 = vector.load %arg9[%c40_75, %c0_76] : memref<72x512xf32, #tpu.memory_space<vmem>>, vector<8x512xf32>
    tpu.vector_store %arg9[%c40_75, %c0_76], %156 {strides = array<i32>} : memref<72x512xf32, #tpu.memory_space<vmem>>, vector<8x512xf32>,
    %c497_i32_77 = arith.constant 497 : i32
    %158 = tpu.dynamic_rotate %108 by %c497_i32_77 dim 1 : vector<8x512xf32>, i32 -> vector<8x512xf32>
    %cst_78 = arith.constant 1.500000e+01 : f32
    %159 = vector.broadcast %cst_78 : f32 to vector<1x512xf32>
    %160 = arith.cmpf olt, %14, %159 : vector<1x512xf32>
    %cst_79 = arith.constant 1.000000e+00 : f32
    %161 = vector.broadcast %cst_79 : f32 to vector<1x512xf32>
    %162 = arith.cmpf oge, %17, %161 : vector<1x512xf32>
    %163 = arith.andi %160, %162 : vector<1x512xi1>
    %cst_80 = arith.constant 0.000000e+00 : f32
    %164 = vector.shape_cast %163 : vector<1x512xi1> to vector<1x512xi1>
    %165 = vector.broadcast %164 : vector<1x512xi1> to vector<8x512xi1>
    %166 = vector.broadcast %cst_80 : f32 to vector<8x512xf32>
    %167 = arith.select %165, %158, %166 : vector<8x512xi1>, vector<8x512xf32>
    %c48_81 = arith.constant 48 : index
    %c0_82 = arith.constant 0 : index
    %168 = vector.load %arg9[%c48_81, %c0_82] : memref<72x512xf32, #tpu.memory_space<vmem>>, vector<8x512xf32>
    tpu.vector_store %arg9[%c48_81, %c0_82], %167 {strides = array<i32>} : memref<72x512xf32, #tpu.memory_space<vmem>>, vector<8x512xf32>,
    %c496_i32_83 = arith.constant 496 : i32
    %169 = tpu.dynamic_rotate %108 by %c496_i32_83 dim 1 : vector<8x512xf32>, i32 -> vector<8x512xf32>
    %cst_84 = arith.constant 1.500000e+01 : f32
    %170 = vector.broadcast %cst_84 : f32 to vector<1x512xf32>
    %171 = arith.cmpf olt, %14, %170 : vector<1x512xf32>
    %cst_85 = arith.constant 0.000000e+00 : f32
    %172 = vector.shape_cast %171 : vector<1x512xi1> to vector<1x512xi1>
    %173 = vector.broadcast %172 : vector<1x512xi1> to vector<8x512xi1>
    %174 = vector.broadcast %cst_85 : f32 to vector<8x512xf32>
    %175 = arith.select %173, %169, %174 : vector<8x512xi1>, vector<8x512xf32>
    %c56_86 = arith.constant 56 : index
    %c0_87 = arith.constant 0 : index
    %176 = vector.load %arg9[%c56_86, %c0_87] : memref<72x512xf32, #tpu.memory_space<vmem>>, vector<8x512xf32>
    tpu.vector_store %arg9[%c56_86, %c0_87], %175 {strides = array<i32>} : memref<72x512xf32, #tpu.memory_space<vmem>>, vector<8x512xf32>,
    %c495_i32_88 = arith.constant 495 : i32
    %177 = tpu.dynamic_rotate %108 by %c495_i32_88 dim 1 : vector<8x512xf32>, i32 -> vector<8x512xf32>
    %cst_89 = arith.constant 1.500000e+01 : f32
    %178 = vector.broadcast %cst_89 : f32 to vector<1x512xf32>
    %179 = arith.cmpf olt, %14, %178 : vector<1x512xf32>
    %cst_90 = arith.constant 1.500000e+01 : f32
    %180 = vector.broadcast %cst_90 : f32 to vector<1x512xf32>
    %181 = arith.cmpf olt, %17, %180 : vector<1x512xf32>
    %182 = arith.andi %179, %181 : vector<1x512xi1>
    %cst_91 = arith.constant 0.000000e+00 : f32
    %183 = vector.shape_cast %182 : vector<1x512xi1> to vector<1x512xi1>
    %184 = vector.broadcast %183 : vector<1x512xi1> to vector<8x512xi1>
    %185 = vector.broadcast %cst_91 : f32 to vector<8x512xf32>
    %186 = arith.select %184, %177, %185 : vector<8x512xi1>, vector<8x512xf32>
    %c64_92 = arith.constant 64 : index
    %c0_93 = arith.constant 0 : index
    %187 = vector.load %arg9[%c64_92, %c0_93] : memref<72x512xf32, #tpu.memory_space<vmem>>, vector<8x512xf32>
    tpu.vector_store %arg9[%c64_92, %c0_93], %186 {strides = array<i32>} : memref<72x512xf32, #tpu.memory_space<vmem>>, vector<8x512xf32>,
    %c0_94 = arith.constant 0 : index
    %c0_95 = arith.constant 0 : index
    %188 = vector.load %arg9[%c0_94, %c0_95] : memref<72x512xf32, #tpu.memory_space<vmem>>, vector<72x512xf32>
    %189 = arith.truncf %188 : vector<72x512xf32> to vector<72x512xbf16>
    %cst_96 = arith.constant dense<0.000000e+00> : vector<8x512xf32>
    %190 = tpu.matmul %110, %189, %cst_96 {dimension_numbers = #tpu.dot_dimension_numbers<[1], [0], [0], [1], [0, 0, 1, 1], [], []>} : vector<8x72xbf16>, vector<72x512xbf16>, vector<8x512xf32> -> vector<8x512xf32>
    %c0_97 = arith.constant 0 : index
    %c0_98 = arith.constant 0 : index
    %191 = vector.load %arg6[%c0_97, %c0_98] : memref<8x1xf32, #tpu.memory_space<vmem>>, vector<8x1xf32>
    %192 = vector.broadcast %191 : vector<8x1xf32> to vector<8x512xf32>
    %193 = arith.mulf %190, %192 : vector<8x512xf32>
    %c0_99 = arith.constant 0 : index
    %c0_100 = arith.constant 0 : index
    %194 = vector.load %arg7[%c0_99, %c0_100] : memref<8x1xf32, #tpu.memory_space<vmem>>, vector<8x1xf32>
    %195 = vector.broadcast %194 : vector<8x1xf32> to vector<8x512xf32>
    %196 = arith.addf %193, %195 : vector<8x512xf32>
    %197 = arith.addf %196, %109 : vector<8x512xf32>
    %cst_101 = arith.constant 0.000000e+00 : f32
    %198 = vector.broadcast %cst_101 : f32 to vector<8x512xf32>
    %199 = arith.maximumf %197, %198 : vector<8x512xf32>
    %c511_i32_102 = arith.constant 511 : i32
    %200 = tpu.dynamic_rotate %199 by %c511_i32_102 dim 1 : vector<8x512xf32>, i32 -> vector<8x512xf32>
    %201 = arith.maximumf %199, %200 : vector<8x512xf32>
    %c496_i32_103 = arith.constant 496 : i32
    %202 = tpu.dynamic_rotate %199 by %c496_i32_103 dim 1 : vector<8x512xf32>, i32 -> vector<8x512xf32>
    %203 = arith.maximumf %201, %202 : vector<8x512xf32>
    %c495_i32_104 = arith.constant 495 : i32
    %204 = tpu.dynamic_rotate %199 by %c495_i32_104 dim 1 : vector<8x512xf32>, i32 -> vector<8x512xf32>
    %205 = arith.maximumf %203, %204 : vector<8x512xf32>
    %c0_105 = arith.constant 0 : index
    %c0_106 = arith.constant 0 : index
    %206 = vector.load %arg8[%c0_105, %c0_106] : memref<8x512xf32, #tpu.memory_space<vmem>>, vector<8x512xf32>
    tpu.vector_store %arg8[%c0_105, %c0_106], %205 {strides = array<i32>} : memref<8x512xf32, #tpu.memory_space<vmem>>, vector<8x512xf32>,
    return
  }
  func.func @transform_0(%arg0: i32) -> (i32, i32) {
    %c0_i32 = arith.constant 0 : i32
    %c0_i32_0 = arith.constant 0 : i32
    return %c0_i32, %arg0 : i32, i32
  }
  func.func @transform_1(%arg0: i32) -> (i32, i32) {
    %c0_i32 = arith.constant 0 : i32
    %c0_i32_0 = arith.constant 0 : i32
    %c0_i32_1 = arith.constant 0 : i32
    return %c0_i32, %c0_i32_0 : i32, i32
  }
  func.func @transform_2(%arg0: i32) -> (i32, i32) {
    %c0_i32 = arith.constant 0 : i32
    %c0_i32_0 = arith.constant 0 : i32
    %c0_i32_1 = arith.constant 0 : i32
    return %c0_i32, %c0_i32_0 : i32, i32
  }
  func.func @transform_3(%arg0: i32) -> (i32, i32) {
    %c0_i32 = arith.constant 0 : i32
    %c0_i32_0 = arith.constant 0 : i32
    %c0_i32_1 = arith.constant 0 : i32
    return %c0_i32, %c0_i32_0 : i32, i32
  }
  func.func @transform_4(%arg0: i32) -> (i32, i32) {
    %c0_i32 = arith.constant 0 : i32
    %c0_i32_0 = arith.constant 0 : i32
    %c0_i32_1 = arith.constant 0 : i32
    return %c0_i32, %c0_i32_0 : i32, i32
  }
  func.func @transform_5(%arg0: i32) -> (i32, i32) {
    %c0_i32 = arith.constant 0 : i32
    %c0_i32_0 = arith.constant 0 : i32
    %c0_i32_1 = arith.constant 0 : i32
    return %c0_i32, %c0_i32_0 : i32, i32
  }
  func.func @transform_6(%arg0: i32) -> (i32, i32) {
    %c0_i32 = arith.constant 0 : i32
    %c0_i32_0 = arith.constant 0 : i32
    %c0_i32_1 = arith.constant 0 : i32
    return %c0_i32, %c0_i32_0 : i32, i32
  }
  func.func @transform_7(%arg0: i32) -> (i32, i32) {
    %c0_i32 = arith.constant 0 : i32
    %c0_i32_0 = arith.constant 0 : i32
    return %c0_i32, %arg0 : i32, i32
  }
}

</mosaic_0001>

<llo_original>
// kernel: basic_block_forward.1
$region0: #{basic_block_forward.1}
  #allocation0 [shape = 'u32[]', space=smem, size = 0x4, offset = 0x4, fixed_abs, tag = 'smem constant byte address 0x4 - core index']
  #allocation1 [shape = 'u32[72,128]{1,0:T(1,128)}', space=vmem, size = 0x9000, scoped, tag = 'internal scratch']
  #allocation2 [shape = 'f32[72,512]{1,0:T(8,128)}', space=vmem, size = 0x24000, scoped, tag = 'scratch operand']
  %s0 = inlined_call_operand.vmem [shape: f32[8,1024], index: 0, kind: input, shape index: {}]
  %s1 = inlined_call_operand.vmem [shape: bf16[16,72], index: 1, kind: input, shape index: {}]
  %s2 = inlined_call_operand.vmem [shape: f32[16,1], index: 2, kind: input, shape index: {}]
  %s3 = inlined_call_operand.vmem [shape: f32[16,1], index: 3, kind: input, shape index: {}]
  %s4 = inlined_call_operand.vmem [shape: bf16[8,72], index: 4, kind: input, shape index: {}]
  %s5 = inlined_call_operand.vmem [shape: f32[8,1], index: 5, kind: input, shape index: {}]
  %s6 = inlined_call_operand.vmem [shape: f32[8,1], index: 6, kind: input, shape index: {}]
  %s7 = inlined_call_operand.vmem [shape: f32[8,1024], index: 7, kind: output, shape index: {}]
  %s8 = sld [smem:[#allocation0]]
  $region61: #{basic_block_forward.1} parent=0
    _
  %s10 = ssub.s32 1, %s8
  %s11 = scalar_select 0, %s10, %s8
  loop: start=0, step=1, limit=4
  $region2: #{basic_block_forward.1} parent=0 // loop_pre_header
    _
  $region3: #{basic_block_forward.1} parent=0 // loop_header
    %s13 = sphi 0, %s17
    %p14 = scmp.ge.s32.totalorder %s13, 4
    %s23 = sphi 0, %s25
    %s26 = sphi 0, %s23
    %s27 = sphi 0, %s26
    %s43 = sphi 0, %s27
    %s47 = sphi 0, %s47
    %s49 = sphi 0, %s47
    %s50 = sphi 0, %s49
    %s64 = sphi 0, %s50
    %s68 = sphi 0, %s68
    %s70 = sphi 0, %s68
    %s71 = sphi 0, %s70
    %s85 = sphi 0, %s71
    %s89 = sphi 0, %s89
    %s91 = sphi 0, %s89
    %s92 = sphi 0, %s91
    %s106 = sphi 0, %s92
    %s110 = sphi 0, %s110
    %s112 = sphi 0, %s110
    %s113 = sphi 0, %s112
    %s127 = sphi 0, %s113
    %s131 = sphi 0, %s131
    %s133 = sphi 0, %s131
    %s134 = sphi 0, %s133
    %s148 = sphi 0, %s134
    %s152 = sphi 0, %s152
    %s154 = sphi 0, %s152
    %s155 = sphi 0, %s154
    %s169 = sphi 0, %s155
    %s175 = sphi 0, %s177
    %s178 = sphi 0, %s175
    %s179 = sphi 0, %s178
    %s195 = sphi 0, %s179
  $region4: #{basic_block_forward.1} parent=0 // loop_header_branch
    %16 = sbr.rel (%p14) target = $region8
  $region5: #{basic_block_forward.1} parent=0 // loop_body
    %s18 = ssub.s32 %s13, 1
    %s19 = ssub.s32 %s13, 2
    %s20 = sadd.s32 %s13, 1
    %s21 = ssub.s32 %s13, %s20
    %p22 = scmp.eq.s32.totalorder %s21, 0
    %s24 = sadd.s32 %s23, 1
    %s25 = scalar_select %p22, %s23, %s24
    %p28 = pneg %p22
    %p29 = scmp.eq.s32.totalorder %s13, 1
    %p30 = por %p28, %p29
    %p31 = scmp.ne.s32.totalorder %s23, %s26
    %p32 = scmp.eq.s32.totalorder %s13, 0
    %p33 = por %p31, %p32
    %p34 = scmp.ne.s32.totalorder %s23, %s26
    %p35 = scmp.eq.s32.totalorder %s18, 1
    %p36 = por %p34, %p35
    %p37 = scmp.ne.s32.totalorder %s26, %s27
    %p38 = scmp.eq.s32.totalorder %s18, 0
    %p39 = por %p37, %p38
    %p40 = scmp.ne.s32.totalorder %s26, %s27
    %p41 = scmp.eq.s32.totalorder %s19, 1
    %p42 = por %p40, %p41
    %p44 = scmp.ne.s32.totalorder %s27, %s43
    %p45 = scmp.eq.s32.totalorder %s19, 0
    %p46 = por %p44, %p45
    %s48 = sadd.s32 %s47, 1
    %p51 = scmp.eq.s32.totalorder %s13, 1
    %p52 = scmp.ne.s32.totalorder %s47, %s49
    %p53 = scmp.eq.s32.totalorder %s13, 0
    %p54 = por %p52, %p53
    %p55 = scmp.ne.s32.totalorder %s47, %s49
    %p56 = scmp.eq.s32.totalorder %s18, 1
    %p57 = por %p55, %p56
    %p58 = scmp.ne.s32.totalorder %s49, %s50
    %p59 = scmp.eq.s32.totalorder %s18, 0
    %p60 = por %p58, %p59
    %p61 = scmp.ne.s32.totalorder %s49, %s50
    %p62 = scmp.eq.s32.totalorder %s19, 1
    %p63 = por %p61, %p62
    %p65 = scmp.ne.s32.totalorder %s50, %s64
    %p66 = scmp.eq.s32.totalorder %s19, 0
    %p67 = por %p65, %p66
    %s69 = sadd.s32 %s68, 1
    %p72 = scmp.eq.s32.totalorder %s13, 1
    %p73 = scmp.ne.s32.totalorder %s68, %s70
    %p74 = scmp.eq.s32.totalorder %s13, 0
    %p75 = por %p73, %p74
    %p76 = scmp.ne.s32.totalorder %s68, %s70
    %p77 = scmp.eq.s32.totalorder %s18, 1
    %p78 = por %p76, %p77
    %p79 = scmp.ne.s32.totalorder %s70, %s71
    %p80 = scmp.eq.s32.totalorder %s18, 0
    %p81 = por %p79, %p80
    %p82 = scmp.ne.s32.totalorder %s70, %s71
    %p83 = scmp.eq.s32.totalorder %s19, 1
    %p84 = por %p82, %p83
    %p86 = scmp.ne.s32.totalorder %s71, %s85
    %p87 = scmp.eq.s32.totalorder %s19, 0
    %p88 = por %p86, %p87
    %s90 = sadd.s32 %s89, 1
    %p93 = scmp.eq.s32.totalorder %s13, 1
    %p94 = scmp.ne.s32.totalorder %s89, %s91
    %p95 = scmp.eq.s32.totalorder %s13, 0
    %p96 = por %p94, %p95
    %p97 = scmp.ne.s32.totalorder %s89, %s91
    %p98 = scmp.eq.s32.totalorder %s18, 1
    %p99 = por %p97, %p98
    %p100 = scmp.ne.s32.totalorder %s91, %s92
    %p101 = scmp.eq.s32.totalorder %s18, 0
    %p102 = por %p100, %p101
    %p103 = scmp.ne.s32.totalorder %s91, %s92
    %p104 = scmp.eq.s32.totalorder %s19, 1
    %p105 = por %p103, %p104
    %p107 = scmp.ne.s32.totalorder %s92, %s106
    %p108 = scmp.eq.s32.totalorder %s19, 0
    %p109 = por %p107, %p108
    %s111 = sadd.s32 %s110, 1
    %p114 = scmp.eq.s32.totalorder %s13, 1
    %p115 = scmp.ne.s32.totalorder %s110, %s112
    %p116 = scmp.eq.s32.totalorder %s13, 0
    %p117 = por %p115, %p116
    %p118 = scmp.ne.s32.totalorder %s110, %s112
    %p119 = scmp.eq.s32.totalorder %s18, 1
    %p120 = por %p118, %p119
    %p121 = scmp.ne.s32.totalorder %s112, %s113
    %p122 = scmp.eq.s32.totalorder %s18, 0
    %p123 = por %p121, %p122
    %p124 = scmp.ne.s32.totalorder %s112, %s113
    %p125 = scmp.eq.s32.totalorder %s19, 1
    %p126 = por %p124, %p125
    %p128 = scmp.ne.s32.totalorder %s113, %s127
    %p129 = scmp.eq.s32.totalorder %s19, 0
    %p130 = por %p128, %p129
    %s132 = sadd.s32 %s131, 1
    %p135 = scmp.eq.s32.totalorder %s13, 1
    %p136 = scmp.ne.s32.totalorder %s131, %s133
    %p137 = scmp.eq.s32.totalorder %s13, 0
    %p138 = por %p136, %p137
    %p139 = scmp.ne.s32.totalorder %s131, %s133
    %p140 = scmp.eq.s32.totalorder %s18, 1
    %p141 = por %p139, %p140
    %p142 = scmp.ne.s32.totalorder %s133, %s134
    %p143 = scmp.eq.s32.totalorder %s18, 0
    %p144 = por %p142, %p143
    %p145 = scmp.ne.s32.totalorder %s133, %s134
    %p146 = scmp.eq.s32.totalorder %s19, 1
    %p147 = por %p145, %p146
    %p149 = scmp.ne.s32.totalorder %s134, %s148
    %p150 = scmp.eq.s32.totalorder %s19, 0
    %p151 = por %p149, %p150
    %s153 = sadd.s32 %s152, 1
    %p156 = scmp.eq.s32.totalorder %s13, 1
    %p157 = scmp.ne.s32.totalorder %s152, %s154
    %p158 = scmp.eq.s32.totalorder %s13, 0
    %p159 = por %p157, %p158
    %p160 = scmp.ne.s32.totalorder %s152, %s154
    %p161 = scmp.eq.s32.totalorder %s18, 1
    %p162 = por %p160, %p161
    %p163 = scmp.ne.s32.totalorder %s154, %s155
    %p164 = scmp.eq.s32.totalorder %s18, 0
    %p165 = por %p163, %p164
    %p166 = scmp.ne.s32.totalorder %s154, %s155
    %p167 = scmp.eq.s32.totalorder %s19, 1
    %p168 = por %p166, %p167
    %p170 = scmp.ne.s32.totalorder %s155, %s169
    %p171 = scmp.eq.s32.totalorder %s19, 0
    %p172 = por %p170, %p171
    %s173 = ssub.s32 %s13, %s20
    %p174 = scmp.eq.s32.totalorder %s173, 0
    %s176 = sadd.s32 %s175, 1
    %s177 = scalar_select %p174, %s175, %s176
    %p180 = pneg %p174
    %p181 = scmp.eq.s32.totalorder %s13, 1
    %p182 = por %p180, %p181
    %p183 = scmp.ne.s32.totalorder %s175, %s178
    %p184 = scmp.eq.s32.totalorder %s13, 0
    %p185 = por %p183, %p184
    %p186 = scmp.ne.s32.totalorder %s175, %s178
    %p187 = scmp.eq.s32.totalorder %s18, 1
    %p188 = por %p186, %p187
    %p189 = scmp.ne.s32.totalorder %s178, %s179
    %p190 = scmp.eq.s32.totalorder %s18, 0
    %p191 = por %p189, %p190
    %p192 = scmp.ne.s32.totalorder %s178, %s179
    %p193 = scmp.eq.s32.totalorder %s19, 1
    %p194 = por %p192, %p193
    %p196 = scmp.ne.s32.totalorder %s179, %s195
    %p197 = scmp.eq.s32.totalorder %s19, 0
    %p198 = por %p196, %p197
    %p199 = scmp.le.s32.totalorder 1, %s13
    %p200 = scmp.lt.s32.totalorder %s13, 3
    %p201 = pnand %p199, %p200
    %p202 = pneg %p201
    // Predicated region
    $region9: #{basic_block_forward.1} parent=5 // pred_check
      _
    $region10: #{basic_block_forward.1} parent=5 // pred_check_branch
      %204 = sbr.rel (%p201) target = $region12
    $region11: #{basic_block_forward.1} parent=5 // pred_region
      %s205 = ssub.s32 %s13, 1
      // Predicated region
      $region13: #{basic_block_forward.1} parent=11 // pred_check
        %p206 = pneg %p60
      $region14: #{basic_block_forward.1} parent=11 // pred_check_branch
        %208 = sbr.rel (%p206) target = $region16
      $region15: #{basic_block_forward.1} parent=11 // pred_region
        _
      $region16: #{basic_block_forward.1} parent=11 // pred_fallthru
        _
      // Predicated region
      $region17: #{basic_block_forward.1} parent=11 // pred_check
        %p209 = pneg %p81
      $region18: #{basic_block_forward.1} parent=11 // pred_check_branch
        %211 = sbr.rel (%p209) target = $region20
      $region19: #{basic_block_forward.1} parent=11 // pred_region
        _
      $region20: #{basic_block_forward.1} parent=11 // pred_fallthru
        _
      // Predicated region
      $region21: #{basic_block_forward.1} parent=11 // pred_check
        %p212 = pneg %p102
      $region22: #{basic_block_forward.1} parent=11 // pred_check_branch
        %214 = sbr.rel (%p212) target = $region24
      $region23: #{basic_block_forward.1} parent=11 // pred_region
        _
      $region24: #{basic_block_forward.1} parent=11 // pred_fallthru
        _
      // Predicated region
      $region25: #{basic_block_forward.1} parent=11 // pred_check
        %p215 = pneg %p123
      $region26: #{basic_block_forward.1} parent=11 // pred_check_branch
        %217 = sbr.rel (%p215) target = $region28
      $region27: #{basic_block_forward.1} parent=11 // pred_region
        _
      $region28: #{basic_block_forward.1} parent=11 // pred_fallthru
        _
      // Predicated region
      $region29: #{basic_block_forward.1} parent=11 // pred_check
        %p218 = pneg %p144
      $region30: #{basic_block_forward.1} parent=11 // pred_check_branch
        %220 = sbr.rel (%p218) target = $region32
      $region31: #{basic_block_forward.1} parent=11 // pred_region
        _
      $region32: #{basic_block_forward.1} parent=11 // pred_fallthru
        _
      // Predicated region
      $region33: #{basic_block_forward.1} parent=11 // pred_check
        %p221 = pneg %p165
      $region34: #{basic_block_forward.1} parent=11 // pred_check_branch
        %223 = sbr.rel (%p221) target = $region36
      $region35: #{basic_block_forward.1} parent=11 // pred_region
        _
      $region36: #{basic_block_forward.1} parent=11 // pred_fallthru
        _
    $region12: #{basic_block_forward.1} parent=5 // pred_fallthru
      _
    %p224 = scmp.lt.s32.totalorder %s13, 2
    // Predicated region
    $region37: #{basic_block_forward.1} parent=5 // pred_check
      %p225 = pneg %p224
    $region38: #{basic_block_forward.1} parent=5 // pred_check_branch
      %227 = sbr.rel (%p225) target = $region40
    $region39: #{basic_block_forward.1} parent=5 // pred_region
      // Predicated region
      $region41: #{basic_block_forward.1} parent=39 // pred_check
        %p228 = pneg %p33
      $region42: #{basic_block_forward.1} parent=39 // pred_check_branch
        %230 = sbr.rel (%p228) target = $region44
      $region43: #{basic_block_forward.1} parent=39 // pred_region
        %s231 = smul.u32 4, %s13
        %p232 = scmp.lt.s32.totalorder %s231, 7
        %s233 = scalar_select %p232, %s231, 7
        %s234 = smul.addr %s233, 8
        %s235 = scalar_lea.vmem %s0, %s234
        %s236 = smul.u32 4, %s13
      $region44: #{basic_block_forward.1} parent=39 // pred_fallthru
        _
    $region40: #{basic_block_forward.1} parent=5 // pred_fallthru
      _
    %p237 = scmp.le.s32.totalorder 1, %s13
    %p238 = scmp.lt.s32.totalorder %s13, 3
    %p239 = pnand %p237, %p238
    %p240 = pneg %p239
    // Predicated region
    $region45: #{basic_block_forward.1} parent=5 // pred_check
      _
    $region46: #{basic_block_forward.1} parent=5 // pred_check_branch
      %242 = sbr.rel (%p239) target = $region48
    $region47: #{basic_block_forward.1} parent=5 // pred_region
      %s243 = ssub.s32 %s13, 1
      %s244 = smul.u32 4, %s18
      %p245 = scmp.lt.s32.totalorder %s244, 7
      %s246 = scalar_select %p245, %s244, 7
      %s247 = smul.addr %s246, 8
      %s248 = scalar_lea.vmem %s0, %s247
      %p249 = pneg %p39
      %p250 = pneg %p36
      %p251 = pneg %p60
      %p252 = pneg %p57
      %p253 = pneg %p81
      %p254 = pneg %p78
      %p255 = pneg %p102
      %p256 = pneg %p99
      %p257 = pneg %p123
      %p258 = pneg %p120
      %p259 = pneg %p144
      %p260 = pneg %p141
      %p261 = pneg %p165
      %p262 = pneg %p162
      %p263 = pneg %p191
      %p264 = pneg %p188
      %s265 = smul.u32 4, %s18
      %p266 = scmp.lt.s32.totalorder %s265, 7
      %s267 = scalar_select %p266, %s265, 7
      %s268 = smul.addr %s267, 8
      %s269 = scalar_lea.vmem %s7, %s268
      %s270 = smul.u32 4, %s18
      %p271 = scmp.lt.s32.totalorder %s270, 7
      %s272 = scalar_select %p271, %s270, 7
      %s273 = smul.addr %s272, 8
      %s274 = scalar_lea.vmem %s0, %s273
      %s275 = smul.u32 4, %s18
      %s276 = smul.u32 4, %s18
      %p277 = scmp.lt.s32.totalorder %s276, 7
      %s278 = scalar_select %p277, %s276, 7
      %s279 = smul.addr %s278, 8
      %s280 = scalar_lea.vmem %s7, %s279
      %s281 = smul.u32 4, %s18
      %v283 = vlaneseq
      %v284 = vand.u32 %v283, 127
      %v285 = vadd.s32 %v284, 128
      %v286 = vadd.s32 %v284, 256
      %v287 = vadd.s32 %v284, 384
      %v288 = vcvt.s32.f32 %v284
      %v289 = vcvt.s32.f32 %v285
      %v290 = vcvt.s32.f32 %v286
      %v291 = vcvt.s32.f32 %v287
      %v292 = vadd.f32 %v288, 0.5
      %v293 = vadd.f32 %v289, 0.5
      %v294 = vadd.f32 %v290, 0.5
      %v295 = vadd.f32 %v291, 0.5
      %v296 = vmul.f32 %v292, 0.00390625
      %v297 = vmul.f32 %v293, 0.00390625
      %v298 = vmul.f32 %v294, 0.00390625
      %v299 = vmul.f32 %v295, 0.00390625
      %v300 = vfloor.f32 %v296
      %v301 = vfloor.f32 %v297
      %v302 = vfloor.f32 %v298
      %v303 = vfloor.f32 %v299
      %v304 = vmul.f32 %v300, 256.0
      %v305 = vmul.f32 %v301, 256.0
      %v306 = vmul.f32 %v302, 256.0
      %v307 = vmul.f32 %v303, 256.0
      %v308 = vsub.f32 %v288, %v304
      %v309 = vsub.f32 %v289, %v305
      %v310 = vsub.f32 %v290, %v306
      %v311 = vsub.f32 %v291, %v307
      %v312 = vadd.f32 %v308, 0.5
      %v313 = vadd.f32 %v309, 0.5
      %v314 = vadd.f32 %v310, 0.5
      %v315 = vadd.f32 %v311, 0.5
      %v316 = vmul.f32 %v312, 0.0625
      %v317 = vmul.f32 %v313, 0.0625
      %v318 = vmul.f32 %v314, 0.0625
      %v319 = vmul.f32 %v315, 0.0625
      %v320 = vfloor.f32 %v316
      %v321 = vfloor.f32 %v317
      %v322 = vfloor.f32 %v318
      %v323 = vfloor.f32 %v319
      %v324 = vmul.f32 %v320, 16.0
      %v325 = vmul.f32 %v321, 16.0
      %v326 = vmul.f32 %v322, 16.0
      %v327 = vmul.f32 %v323, 16.0
      %v328 = vsub.f32 %v308, %v324
      %v329 = vsub.f32 %v309, %v325
      %v330 = vsub.f32 %v310, %v326
      %v331 = vsub.f32 %v311, %v327
      %v332 = vld [vmem:[%s274] sm:$0xff]
      %v333 = vld [vmem:[%s274 + $0x8] sm:$0xff]
      %v334 = vld [vmem:[%s274 + $0x10] sm:$0xff]
      %v335 = vld [vmem:[%s274 + $0x18] sm:$0xff]
      %v336 = vld [vmem:[%s1] sm:$0xf]
      %v337 = vld [vmem:[%s1 + $0x4] sm:$0xf]
      %338 = vrot.lane.b32.xlu0 %v332, 17
      %v339 = vpop.permute.xlu0 %338
      %340 = vrot.lane.b32.xlu0 %v333, 17
      %v341 = vpop.permute.xlu0 %340
      %342 = vrot.lane.b32.xlu0 %v334, 17
      %v343 = vpop.permute.xlu0 %342
      %344 = vrot.lane.b32.xlu0 %v335, 17
      %v345 = vpop.permute.xlu0 %344
      %vm346 = vcmp.lt.s32.totalorder %v284, 17
      %v347 = vsel %vm346, %v343, %v345
      %v348 = vsel %vm346, %v341, %v343
      %v349 = vsel %vm346, %v339, %v341
      %v350 = vsel %vm346, %v345, %v339
      %vm351 = vcmp.ge.f32.partialorder %v320, 1.0
      %vm352 = vcmp.ge.f32.partialorder %v321, 1.0
      %vm353 = vcmp.ge.f32.partialorder %v322, 1.0
      %vm354 = vcmp.ge.f32.partialorder %v323, 1.0
      %vm355 = vcmp.ge.f32.partialorder %v328, 1.0
      %vm356 = vcmp.ge.f32.partialorder %v329, 1.0
      %vm357 = vcmp.ge.f32.partialorder %v330, 1.0
      %vm358 = vcmp.ge.f32.partialorder %v331, 1.0
      %vm359 = vmand %vm351, %vm355
      %vm360 = vmand %vm352, %vm356
      %vm361 = vmand %vm353, %vm357
      %vm362 = vmand %vm354, %vm358
      %v363 = vsel %vm359, 1, 0
      %v364 = vsel %vm360, 1, 0
      %v365 = vsel %vm361, 1, 0
      %v366 = vsel %vm362, 1, 0
      %vm367 = vcmp.eq.s32.totalorder %v363, 1
      %vm368 = vcmp.eq.s32.totalorder %v364, 1
      %vm369 = vcmp.eq.s32.totalorder %v365, 1
      %vm370 = vcmp.eq.s32.totalorder %v366, 1
      %v371 = vsel %vm367, %v350, 0.0
      %v372 = vsel %vm368, %v349, 0.0
      %v373 = vsel %vm369, %v348, 0.0
      %v374 = vsel %vm370, %v347, 0.0
      %375 = vst [vmem:[#allocation2] sm:$0xff] %v371
      %376 = vst [vmem:[#allocation2 + $0x8] sm:$0xff] %v372
      %377 = vst [vmem:[#allocation2 + $0x10] sm:$0xff] %v373
      %378 = vst [vmem:[#allocation2 + $0x18] sm:$0xff] %v374
      %379 = vrot.lane.b32.xlu0 %v332, 16
      %v380 = vpop.permute.xlu0 %379
      %381 = vrot.lane.b32.xlu0 %v333, 16
      %v382 = vpop.permute.xlu0 %381
      %383 = vrot.lane.b32.xlu0 %v334, 16
      %v384 = vpop.permute.xlu0 %383
      %385 = vrot.lane.b32.xlu0 %v335, 16
      %v386 = vpop.permute.xlu0 %385
      %vm387 = vcmp.lt.s32.totalorder %v284, 16
      %v388 = vsel %vm387, %v384, %v386
      %v389 = vsel %vm387, %v382, %v384
      %v390 = vsel %vm387, %v380, %v382
      %v391 = vsel %vm387, %v386, %v380
      %v392 = vsel %vm351, 1, 0
      %v393 = vsel %vm352, 1, 0
      %v394 = vsel %vm353, 1, 0
      %v395 = vsel %vm354, 1, 0
      %vm396 = vcmp.eq.s32.totalorder %v392, 1
      %vm397 = vcmp.eq.s32.totalorder %v393, 1
      %vm398 = vcmp.eq.s32.totalorder %v394, 1
      %vm399 = vcmp.eq.s32.totalorder %v395, 1
      %v400 = vsel %vm396, %v391, 0.0
      %v401 = vsel %vm397, %v390, 0.0
      %v402 = vsel %vm398, %v389, 0.0
      %v403 = vsel %vm399, %v388, 0.0
      %404 = vst [vmem:[#allocation2 + $0x20] sm:$0xff] %v400
      %405 = vst [vmem:[#allocation2 + $0x28] sm:$0xff] %v401
      %406 = vst [vmem:[#allocation2 + $0x30] sm:$0xff] %v402
      %407 = vst [vmem:[#allocation2 + $0x38] sm:$0xff] %v403
      %408 = vrot.lane.b32.xlu0 %v332, 15
      %v409 = vpop.permute.xlu0 %408
      %410 = vrot.lane.b32.xlu0 %v333, 15
      %v411 = vpop.permute.xlu0 %410
      %412 = vrot.lane.b32.xlu0 %v334, 15
      %v413 = vpop.permute.xlu0 %412
      %414 = vrot.lane.b32.xlu0 %v335, 15
      %v415 = vpop.permute.xlu0 %414
      %vm416 = vcmp.lt.s32.totalorder %v284, 15
      %v417 = vsel %vm416, %v413, %v415
      %v418 = vsel %vm416, %v411, %v413
      %v419 = vsel %vm416, %v409, %v411
      %v420 = vsel %vm416, %v415, %v409
      %vm421 = vcmp.lt.f32.partialorder %v328, 15.0
      %vm422 = vcmp.lt.f32.partialorder %v329, 15.0
      %vm423 = vcmp.lt.f32.partialorder %v330, 15.0
      %vm424 = vcmp.lt.f32.partialorder %v331, 15.0
      %vm425 = vmand %vm351, %vm421
      %vm426 = vmand %vm352, %vm422
      %vm427 = vmand %vm353, %vm423
      %vm428 = vmand %vm354, %vm424
      %v429 = vsel %vm425, 1, 0
      %v430 = vsel %vm426, 1, 0
      %v431 = vsel %vm427, 1, 0
      %v432 = vsel %vm428, 1, 0
      %vm433 = vcmp.eq.s32.totalorder %v429, 1
      %vm434 = vcmp.eq.s32.totalorder %v430, 1
      %vm435 = vcmp.eq.s32.totalorder %v431, 1
      %vm436 = vcmp.eq.s32.totalorder %v432, 1
      %v437 = vsel %vm433, %v420, 0.0
      %v438 = vsel %vm434, %v419, 0.0
      %v439 = vsel %vm435, %v418, 0.0
      %v440 = vsel %vm436, %v417, 0.0
      %441 = vst [vmem:[#allocation2 + $0x40] sm:$0xff] %v437
      %442 = vst [vmem:[#allocation2 + $0x48] sm:$0xff] %v438
      %443 = vst [vmem:[#allocation2 + $0x50] sm:$0xff] %v439
      %444 = vst [vmem:[#allocation2 + $0x58] sm:$0xff] %v440
      %445 = vrot.lane.b32.xlu0 %v332, 1
      %v446 = vpop.permute.xlu0 %445
      %447 = vrot.lane.b32.xlu0 %v333, 1
      %v448 = vpop.permute.xlu0 %447
      %449 = vrot.lane.b32.xlu0 %v334, 1
      %v450 = vpop.permute.xlu0 %449
      %451 = vrot.lane.b32.xlu0 %v335, 1
      %v452 = vpop.permute.xlu0 %451
      %vm453 = vcmp.lt.s32.totalorder %v284, 1
      %v454 = vsel %vm453, %v450, %v452
      %v455 = vsel %vm453, %v448, %v450
      %v456 = vsel %vm453, %v446, %v448
      %v457 = vsel %vm453, %v452, %v446
      %v458 = vsel %vm355, 1, 0
      %v459 = vsel %vm356, 1, 0
      %v460 = vsel %vm357, 1, 0
      %v461 = vsel %vm358, 1, 0
      %vm462 = vcmp.eq.s32.totalorder %v458, 1
      %vm463 = vcmp.eq.s32.totalorder %v459, 1
      %vm464 = vcmp.eq.s32.totalorder %v460, 1
      %vm465 = vcmp.eq.s32.totalorder %v461, 1
      %v466 = vsel %vm462, %v457, 0.0
      %v467 = vsel %vm463, %v456, 0.0
      %v468 = vsel %vm464, %v455, 0.0
      %v469 = vsel %vm465, %v454, 0.0
      %470 = vst [vmem:[#allocation2 + $0x60] sm:$0xff] %v466
      %471 = vst [vmem:[#allocation2 + $0x68] sm:$0xff] %v467
      %472 = vst [vmem:[#allocation2 + $0x70] sm:$0xff] %v468
      %473 = vst [vmem:[#allocation2 + $0x78] sm:$0xff] %v469
      %474 = vst [vmem:[#allocation2 + $0x80] sm:$0xff] %v332
      %475 = vst [vmem:[#allocation2 + $0x88] sm:$0xff] %v333
      %476 = vst [vmem:[#allocation2 + $0x90] sm:$0xff] %v334
      %477 = vst [vmem:[#allocation2 + $0x98] sm:$0xff] %v335
      %478 = vrot.lane.b32.xlu0 %v332, 127
      %v479 = vpop.permute.xlu0 %478
      %480 = vrot.lane.b32.xlu0 %v333, 127
      %v481 = vpop.permute.xlu0 %480
      %482 = vrot.lane.b32.xlu0 %v334, 127
      %v483 = vpop.permute.xlu0 %482
      %484 = vrot.lane.b32.xlu0 %v335, 127
      %v485 = vpop.permute.xlu0 %484
      %vm486 = vcmp.lt.s32.totalorder %v284, 127
      %v487 = vsel %vm486, %v483, %v485
      %v488 = vsel %vm486, %v481, %v483
      %v489 = vsel %vm486, %v479, %v481
      %v490 = vsel %vm486, %v485, %v479
      %v491 = vsel %vm421, 1, 0
      %v492 = vsel %vm422, 1, 0
      %v493 = vsel %vm423, 1, 0
      %v494 = vsel %vm424, 1, 0
      %vm495 = vcmp.eq.s32.totalorder %v491, 1
      %vm496 = vcmp.eq.s32.totalorder %v492, 1
      %vm497 = vcmp.eq.s32.totalorder %v493, 1
      %vm498 = vcmp.eq.s32.totalorder %v494, 1
      %v499 = vsel %vm495, %v489, 0.0
      %v500 = vsel %vm496, %v488, 0.0
      %v501 = vsel %vm497, %v487, 0.0
      %v502 = vsel %vm498, %v490, 0.0
      %503 = vst [vmem:[#allocation2 + $0xa0] sm:$0xff] %v499
      %504 = vst [vmem:[#allocation2 + $0xa8] sm:$0xff] %v500
      %505 = vst [vmem:[#allocation2 + $0xb0] sm:$0xff] %v501
      %506 = vst [vmem:[#allocation2 + $0xb8] sm:$0xff] %v502
      %507 = vrot.lane.b32.xlu0 %v332, 113
      %v508 = vpop.permute.xlu0 %507
      %509 = vrot.lane.b32.xlu0 %v333, 113
      %v510 = vpop.permute.xlu0 %509
      %511 = vrot.lane.b32.xlu0 %v334, 113
      %v512 = vpop.permute.xlu0 %511
      %513 = vrot.lane.b32.xlu0 %v335, 113
      %v514 = vpop.permute.xlu0 %513
      %vm515 = vcmp.lt.s32.totalorder %v284, 113
      %v516 = vsel %vm515, %v512, %v514
      %v517 = vsel %vm515, %v510, %v512
      %v518 = vsel %vm515, %v508, %v510
      %v519 = vsel %vm515, %v514, %v508
      %vm520 = vcmp.lt.f32.partialorder %v320, 15.0
      %vm521 = vcmp.lt.f32.partialorder %v321, 15.0
      %vm522 = vcmp.lt.f32.partialorder %v322, 15.0
      %vm523 = vcmp.lt.f32.partialorder %v323, 15.0
      %vm524 = vmand %vm520, %vm355
      %vm525 = vmand %vm521, %vm356
      %vm526 = vmand %vm522, %vm357
      %vm527 = vmand %vm523, %vm358
      %v528 = vsel %vm524, 1, 0
      %v529 = vsel %vm525, 1, 0
      %v530 = vsel %vm526, 1, 0
      %v531 = vsel %vm527, 1, 0
      %vm532 = vcmp.eq.s32.totalorder %v528, 1
      %vm533 = vcmp.eq.s32.totalorder %v529, 1
      %vm534 = vcmp.eq.s32.totalorder %v530, 1
      %vm535 = vcmp.eq.s32.totalorder %v531, 1
      %v536 = vsel %vm532, %v518, 0.0
      %v537 = vsel %vm533, %v517, 0.0
      %v538 = vsel %vm534, %v516, 0.0
      %v539 = vsel %vm535, %v519, 0.0
      %540 = vst [vmem:[#allocation2 + $0xc0] sm:$0xff] %v536
      %541 = vst [vmem:[#allocation2 + $0xc8] sm:$0xff] %v537
      %542 = vst [vmem:[#allocation2 + $0xd0] sm:$0xff] %v538
      %543 = vst [vmem:[#allocation2 + $0xd8] sm:$0xff] %v539
      %544 = vrot.lane.b32.xlu0 %v332, 112
      %v545 = vpop.permute.xlu0 %544
      %546 = vrot.lane.b32.xlu0 %v333, 112
      %v547 = vpop.permute.xlu0 %546
      %548 = vrot.lane.b32.xlu0 %v334, 112
      %v549 = vpop.permute.xlu0 %548
      %550 = vrot.lane.b32.xlu0 %v335, 112
      %v551 = vpop.permute.xlu0 %550
      %vm552 = vcmp.lt.s32.totalorder %v284, 112
      %v553 = vsel %vm552, %v549, %v551
      %v554 = vsel %vm552, %v547, %v549
      %v555 = vsel %vm552, %v545, %v547
      %v556 = vsel %vm552, %v551, %v545
      %v557 = vsel %vm520, 1, 0
      %v558 = vsel %vm521, 1, 0
      %v559 = vsel %vm522, 1, 0
      %v560 = vsel %vm523, 1, 0
      %vm561 = vcmp.eq.s32.totalorder %v557, 1
      %vm562 = vcmp.eq.s32.totalorder %v558, 1
      %vm563 = vcmp.eq.s32.totalorder %v559, 1
      %vm564 = vcmp.eq.s32.totalorder %v560, 1
      %v565 = vsel %vm561, %v555, 0.0
      %v566 = vsel %vm562, %v554, 0.0
      %v567 = vsel %vm563, %v553, 0.0
      %v568 = vsel %vm564, %v556, 0.0
      %569 = vst [vmem:[#allocation2 + $0xe0] sm:$0xff] %v565
      %570 = vst [vmem:[#allocation2 + $0xe8] sm:$0xff] %v566
      %571 = vst [vmem:[#allocation2 + $0xf0] sm:$0xff] %v567
      %572 = vst [vmem:[#allocation2 + $0xf8] sm:$0xff] %v568
      %573 = vrot.lane.b32.xlu0 %v332, 111
      %v574 = vpop.permute.xlu0 %573
      %575 = vrot.lane.b32.xlu0 %v333, 111
      %v576 = vpop.permute.xlu0 %575
      %577 = vrot.lane.b32.xlu0 %v334, 111
      %v578 = vpop.permute.xlu0 %577
      %579 = vrot.lane.b32.xlu0 %v335, 111
      %v580 = vpop.permute.xlu0 %579
      %vm581 = vcmp.lt.s32.totalorder %v284, 111
      %v582 = vsel %vm581, %v578, %v580
      %v583 = vsel %vm581, %v576, %v578
      %v584 = vsel %vm581, %v574, %v576
      %v585 = vsel %vm581, %v580, %v574
      %vm586 = vmand %vm520, %vm421
      %vm587 = vmand %vm521, %vm422
      %vm588 = vmand %vm522, %vm423
      %vm589 = vmand %vm523, %vm424
      %v590 = vsel %vm586, 1, 0
      %v591 = vsel %vm587, 1, 0
      %v592 = vsel %vm588, 1, 0
      %v593 = vsel %vm589, 1, 0
      %vm594 = vcmp.eq.s32.totalorder %v590, 1
      %vm595 = vcmp.eq.s32.totalorder %v591, 1
      %vm596 = vcmp.eq.s32.totalorder %v592, 1
      %vm597 = vcmp.eq.s32.totalorder %v593, 1
      %v598 = vsel %vm594, %v584, 0.0
      %v599 = vsel %vm595, %v583, 0.0
      %v600 = vsel %vm596, %v582, 0.0
      %v601 = vsel %vm597, %v585, 0.0
      %602 = vst [vmem:[#allocation2 + $0x100] sm:$0xff] %v598
      %603 = vst [vmem:[#allocation2 + $0x108] sm:$0xff] %v599
      %604 = vst [vmem:[#allocation2 + $0x110] sm:$0xff] %v600
      %605 = vst [vmem:[#allocation2 + $0x118] sm:$0xff] %v601
      %v606 = vld [vmem:[#allocation2] sm:$0xff]
      %v607 = vld [vmem:[#allocation2 + $0x8] sm:$0xff]
      %v608 = vld [vmem:[#allocation2 + $0x10] sm:$0xff]
      %v609 = vld [vmem:[#allocation2 + $0x18] sm:$0xff]
      %v610 = vld [vmem:[#allocation2 + $0x20] sm:$0xff]
      %v611 = vld [vmem:[#allocation2 + $0x28] sm:$0xff]
      %v612 = vld [vmem:[#allocation2 + $0x30] sm:$0xff]
      %v613 = vld [vmem:[#allocation2 + $0x38] sm:$0xff]
      %v614 = vld [vmem:[#allocation2 + $0x40] sm:$0xff]
      %v615 = vld [vmem:[#allocation2 + $0x48] sm:$0xff]
      %v616 = vld [vmem:[#allocation2 + $0x50] sm:$0xff]
      %v617 = vld [vmem:[#allocation2 + $0x58] sm:$0xff]
      %v618 = vld [vmem:[#allocation2 + $0x60] sm:$0xff]
      %v619 = vld [vmem:[#allocation2 + $0x68] sm:$0xff]
      %v620 = vld [vmem:[#allocation2 + $0x70] sm:$0xff]
      %v621 = vld [vmem:[#allocation2 + $0x78] sm:$0xff]
      %v622 = vld [vmem:[#allocation2 + $0x80] sm:$0xff]
      %v623 = vld [vmem:[#allocation2 + $0x88] sm:$0xff]
      %v624 = vld [vmem:[#allocation2 + $0x90] sm:$0xff]
      %v625 = vld [vmem:[#allocation2 + $0x98] sm:$0xff]
      %v626 = vld [vmem:[#allocation2 + $0xa0] sm:$0xff]
      %v627 = vld [vmem:[#allocation2 + $0xa8] sm:$0xff]
      %v628 = vld [vmem:[#allocation2 + $0xb0] sm:$0xff]
      %v629 = vld [vmem:[#allocation2 + $0xb8] sm:$0xff]
      %v630 = vld [vmem:[#allocation2 + $0xc0] sm:$0xff]
      %v631 = vld [vmem:[#allocation2 + $0xc8] sm:$0xff]
      %v632 = vld [vmem:[#allocation2 + $0xd0] sm:$0xff]
      %v633 = vld [vmem:[#allocation2 + $0xd8] sm:$0xff]
      %v634 = vld [vmem:[#allocation2 + $0xe0] sm:$0xff]
      %v635 = vld [vmem:[#allocation2 + $0xe8] sm:$0xff]
      %v636 = vld [vmem:[#allocation2 + $0xf0] sm:$0xff]
      %v637 = vld [vmem:[#allocation2 + $0xf8] sm:$0xff]
      %v638 = vld [vmem:[#allocation2 + $0x100] sm:$0xff]
      %v639 = vld [vmem:[#allocation2 + $0x108] sm:$0xff]
      %v640 = vld [vmem:[#allocation2 + $0x110] sm:$0xff]
      %v641 = vld [vmem:[#allocation2 + $0x118] sm:$0xff]
      %v642 = vpack.c.bf16 %v610, %v606
      %v643 = vpack.c.bf16 %v611, %v607
      %v644 = vpack.c.bf16 %v612, %v608
      %v645 = vpack.c.bf16 %v613, %v609
      %v646 = vpack.c.bf16 %v618, %v614
      %v647 = vpack.c.bf16 %v619, %v615
      %v648 = vpack.c.bf16 %v620, %v616
      %v649 = vpack.c.bf16 %v621, %v617
      %v650 = vpack.c.bf16 %v626, %v622
      %v651 = vpack.c.bf16 %v627, %v623
      %v652 = vpack.c.bf16 %v628, %v624
      %v653 = vpack.c.bf16 %v629, %v625
      %v654 = vpack.c.bf16 %v634, %v630
      %v655 = vpack.c.bf16 %v635, %v631
      %v656 = vpack.c.bf16 %v636, %v632
      %v657 = vpack.c.bf16 %v637, %v633
      %v658 = vpack.c.bf16 %v638, %v638
      %v659 = vpack.c.bf16 %v639, %v639
      %v660 = vpack.c.bf16 %v640, %v640
      %v661 = vpack.c.bf16 %v641, %v641
      %v664 = vunpack.c.l.b16 %v336
      %v665 = vunpack.c.l.b16 %v337
      %v666 = vpack.c.b16 %v665, %v664
      %vm667 = vcmask 588800
      %v669 = vsel %vm667, %v666, 0
      %vm671 = vcmask 1043456
      %v673 = vsel %vm671, %v658, 0
      %v676 = vsel %vm671, %v659, 0
      %v679 = vsel %vm671, %v660, 0
      %v682 = vsel %vm671, %v661, 0
      %684 = vmatpush.bf16.msra.mxu0 0
      %685 = vmatpush.bf16.msra.mxu0 0
      %686 = vmatpush.bf16.msra.mxu0 0
      %687 = vmatpush.bf16.msra.mxu0 %v673
      %688 = vmatpush.bf16.msra.mxu0 %v654
      %689 = vmatpush.bf16.msra.mxu0 %v650
      %690 = vmatpush.bf16.msra.mxu0 %v646
      %691 = vmatpush.bf16.msra.mxu0 %v642
      %692 = vmatmul.bf16.gmra.mxu0 %v669
      %v693 = vpop.f32.mrf.mxu0
      %v694 = vadd.f32 0.0, %v693
      %v695 = vpop.f32.mrf.mxu0
      %v696 = vadd.f32 0.0, %v695
      %697 = vdwg.mxu0
      %698 = vmatpush.bf16.msra.mxu0 0
      %699 = vmatpush.bf16.msra.mxu0 0
      %700 = vmatpush.bf16.msra.mxu0 0
      %701 = vmatpush.bf16.msra.mxu0 %v676
      %702 = vmatpush.bf16.msra.mxu0 %v655
      %703 = vmatpush.bf16.msra.mxu0 %v651
      %704 = vmatpush.bf16.msra.mxu0 %v647
      %705 = vmatpush.bf16.msra.mxu0 %v643
      %706 = vmatmul.bf16.gmra.mxu0 %v669
      %v707 = vpop.f32.mrf.mxu0
      %v708 = vadd.f32 0.0, %v707
      %v709 = vpop.f32.mrf.mxu0
      %v710 = vadd.f32 0.0, %v709
      %711 = vdwg.mxu0
      %712 = vmatpush.bf16.msra.mxu0 0
      %713 = vmatpush.bf16.msra.mxu0 0
      %714 = vmatpush.bf16.msra.mxu0 0
      %715 = vmatpush.bf16.msra.mxu0 %v679
      %716 = vmatpush.bf16.msra.mxu0 %v656
      %717 = vmatpush.bf16.msra.mxu0 %v652
      %718 = vmatpush.bf16.msra.mxu0 %v648
      %719 = vmatpush.bf16.msra.mxu0 %v644
      %720 = vmatmul.bf16.gmra.mxu0 %v669
      %v721 = vpop.f32.mrf.mxu0
      %v722 = vadd.f32 0.0, %v721
      %v723 = vpop.f32.mrf.mxu0
      %v724 = vadd.f32 0.0, %v723
      %725 = vdwg.mxu0
      %726 = vmatpush.bf16.msra.mxu0 0
      %727 = vmatpush.bf16.msra.mxu0 0
      %728 = vmatpush.bf16.msra.mxu0 0
      %729 = vmatpush.bf16.msra.mxu0 %v682
      %730 = vmatpush.bf16.msra.mxu0 %v657
      %731 = vmatpush.bf16.msra.mxu0 %v653
      %732 = vmatpush.bf16.msra.mxu0 %v649
      %733 = vmatpush.bf16.msra.mxu0 %v645
      %734 = vmatmul.bf16.gmra.mxu0 %v669
      %v735 = vpop.f32.mrf.mxu0
      %v736 = vadd.f32 0.0, %v735
      %v737 = vpop.f32.mrf.mxu0
      %v738 = vadd.f32 0.0, %v737
      %739 = vdwg.mxu0
      %v740 = vld [vmem:[%s2] sm:$0xff]
      %v741 = vld [vmem:[%s2 + $0x8] sm:$0xff]
      %743 = vset.pattern.permute.xlu0 0
      %744 = vperm.xlu0 %743, %v740
      %v745 = vpop.permute.xlu0 %744
      %748 = vset.pattern.permute.xlu0 0
      %749 = vperm.xlu0 %748, %v741
      %v750 = vpop.permute.xlu0 %749
      %v752 = vmul.f32 %v694, %v745
      %v753 = vmul.f32 %v708, %v745
      %v754 = vmul.f32 %v722, %v745
      %v755 = vmul.f32 %v736, %v745
      %v756 = vmul.f32 %v696, %v750
      %v757 = vmul.f32 %v710, %v750
      %v758 = vmul.f32 %v724, %v750
      %v759 = vmul.f32 %v738, %v750
      %v760 = vld [vmem:[%s3] sm:$0xff]
      %v761 = vld [vmem:[%s3 + $0x8] sm:$0xff]
      %763 = vset.pattern.permute.xlu0 0
      %764 = vperm.xlu0 %763, %v760
      %v765 = vpop.permute.xlu0 %764
      %768 = vset.pattern.permute.xlu0 0
      %769 = vperm.xlu0 %768, %v761
      %v770 = vpop.permute.xlu0 %769
      %v772 = vadd.f32 %v752, %v765
      %v773 = vadd.f32 %v753, %v765
      %v774 = vadd.f32 %v754, %v765
      %v775 = vadd.f32 %v755, %v765
      %v776 = vadd.f32 %v756, %v770
      %v777 = vadd.f32 %v757, %v770
      %v778 = vadd.f32 %v758, %v770
      %v779 = vadd.f32 %v759, %v770
      %v780 = vmax.f32 %v772, 0.0
      %v781 = vmax.f32 %v773, 0.0
      %v782 = vmax.f32 %v774, 0.0
      %v783 = vmax.f32 %v775, 0.0
      %v784 = vld [vmem:[%s4] sm:$0xf]
      %785 = vrot.lane.b32.xlu0 %v780, 17
      %v786 = vpop.permute.xlu0 %785
      %787 = vrot.lane.b32.xlu0 %v781, 17
      %v788 = vpop.permute.xlu0 %787
      %789 = vrot.lane.b32.xlu0 %v782, 17
      %v790 = vpop.permute.xlu0 %789
      %791 = vrot.lane.b32.xlu0 %v783, 17
      %v792 = vpop.permute.xlu0 %791
      %v793 = vsel %vm346, %v790, %v792
      %v794 = vsel %vm346, %v788, %v790
      %v795 = vsel %vm346, %v786, %v788
      %v796 = vsel %vm346, %v792, %v786
      %v797 = vsel %vm367, %v796, 0.0
      %v798 = vsel %vm368, %v795, 0.0
      %v799 = vsel %vm369, %v794, 0.0
      %v800 = vsel %vm370, %v793, 0.0
      %801 = vst [vmem:[#allocation2] sm:$0xff] %v797
      %802 = vst [vmem:[#allocation2 + $0x8] sm:$0xff] %v798
      %803 = vst [vmem:[#allocation2 + $0x10] sm:$0xff] %v799
      %804 = vst [vmem:[#allocation2 + $0x18] sm:$0xff] %v800
      %805 = vrot.lane.b32.xlu0 %v780, 16
      %v806 = vpop.permute.xlu0 %805
      %807 = vrot.lane.b32.xlu0 %v781, 16
      %v808 = vpop.permute.xlu0 %807
      %809 = vrot.lane.b32.xlu0 %v782, 16
      %v810 = vpop.permute.xlu0 %809
      %811 = vrot.lane.b32.xlu0 %v783, 16
      %v812 = vpop.permute.xlu0 %811
      %v813 = vsel %vm387, %v810, %v812
      %v814 = vsel %vm387, %v808, %v810
      %v815 = vsel %vm387, %v806, %v808
      %v816 = vsel %vm387, %v812, %v806
      %v817 = vsel %vm396, %v816, 0.0
      %v818 = vsel %vm397, %v815, 0.0
      %v819 = vsel %vm398, %v814, 0.0
      %v820 = vsel %vm399, %v813, 0.0
      %821 = vst [vmem:[#allocation2 + $0x20] sm:$0xff] %v817
      %822 = vst [vmem:[#allocation2 + $0x28] sm:$0xff] %v818
      %823 = vst [vmem:[#allocation2 + $0x30] sm:$0xff] %v819
      %824 = vst [vmem:[#allocation2 + $0x38] sm:$0xff] %v820
      %825 = vrot.lane.b32.xlu0 %v780, 15
      %v826 = vpop.permute.xlu0 %825
      %827 = vrot.lane.b32.xlu0 %v781, 15
      %v828 = vpop.permute.xlu0 %827
      %829 = vrot.lane.b32.xlu0 %v782, 15
      %v830 = vpop.permute.xlu0 %829
      %831 = vrot.lane.b32.xlu0 %v783, 15
      %v832 = vpop.permute.xlu0 %831
      %v833 = vsel %vm416, %v830, %v832
      %v834 = vsel %vm416, %v828, %v830
      %v835 = vsel %vm416, %v826, %v828
      %v836 = vsel %vm416, %v832, %v826
      %v837 = vsel %vm433, %v836, 0.0
      %v838 = vsel %vm434, %v835, 0.0
      %v839 = vsel %vm435, %v834, 0.0
      %v840 = vsel %vm436, %v833, 0.0
      %841 = vst [vmem:[#allocation2 + $0x40] sm:$0xff] %v837
      %842 = vst [vmem:[#allocation2 + $0x48] sm:$0xff] %v838
      %843 = vst [vmem:[#allocation2 + $0x50] sm:$0xff] %v839
      %844 = vst [vmem:[#allocation2 + $0x58] sm:$0xff] %v840
      %845 = vrot.lane.b32.xlu0 %v780, 1
      %v846 = vpop.permute.xlu0 %845
      %847 = vrot.lane.b32.xlu0 %v781, 1
      %v848 = vpop.permute.xlu0 %847
      %849 = vrot.lane.b32.xlu0 %v782, 1
      %v850 = vpop.permute.xlu0 %849
      %851 = vrot.lane.b32.xlu0 %v783, 1
      %v852 = vpop.permute.xlu0 %851
      %v853 = vsel %vm453, %v850, %v852
      %v854 = vsel %vm453, %v848, %v850
      %v855 = vsel %vm453, %v846, %v848
      %v856 = vsel %vm453, %v852, %v846
      %v857 = vsel %vm462, %v856, 0.0
      %v858 = vsel %vm463, %v855, 0.0
      %v859 = vsel %vm464, %v854, 0.0
      %v860 = vsel %vm465, %v853, 0.0
      %861 = vst [vmem:[#allocation2 + $0x60] sm:$0xff] %v857
      %862 = vst [vmem:[#allocation2 + $0x68] sm:$0xff] %v858
      %863 = vst [vmem:[#allocation2 + $0x70] sm:$0xff] %v859
      %864 = vst [vmem:[#allocation2 + $0x78] sm:$0xff] %v860
      %865 = vst [vmem:[#allocation2 + $0x80] sm:$0xff] %v780
      %866 = vst [vmem:[#allocation2 + $0x88] sm:$0xff] %v781
      %867 = vst [vmem:[#allocation2 + $0x90] sm:$0xff] %v782
      %868 = vst [vmem:[#allocation2 + $0x98] sm:$0xff] %v783
      %869 = vrot.lane.b32.xlu0 %v780, 127
      %v870 = vpop.permute.xlu0 %869
      %871 = vrot.lane.b32.xlu0 %v781, 127
      %v872 = vpop.permute.xlu0 %871
      %873 = vrot.lane.b32.xlu0 %v782, 127
      %v874 = vpop.permute.xlu0 %873
      %875 = vrot.lane.b32.xlu0 %v783, 127
      %v876 = vpop.permute.xlu0 %875
      %v877 = vsel %vm486, %v874, %v876
      %v878 = vsel %vm486, %v872, %v874
      %v879 = vsel %vm486, %v870, %v872
      %v880 = vsel %vm486, %v876, %v870
      %v881 = vsel %vm495, %v879, 0.0
      %v882 = vsel %vm496, %v878, 0.0
      %v883 = vsel %vm497, %v877, 0.0
      %v884 = vsel %vm498, %v880, 0.0
      %885 = vst [vmem:[#allocation2 + $0xa0] sm:$0xff] %v881
      %886 = vst [vmem:[#allocation2 + $0xa8] sm:$0xff] %v882
      %887 = vst [vmem:[#allocation2 + $0xb0] sm:$0xff] %v883
      %888 = vst [vmem:[#allocation2 + $0xb8] sm:$0xff] %v884
      %889 = vrot.lane.b32.xlu0 %v780, 113
      %v890 = vpop.permute.xlu0 %889
      %891 = vrot.lane.b32.xlu0 %v781, 113
      %v892 = vpop.permute.xlu0 %891
      %893 = vrot.lane.b32.xlu0 %v782, 113
      %v894 = vpop.permute.xlu0 %893
      %895 = vrot.lane.b32.xlu0 %v783, 113
      %v896 = vpop.permute.xlu0 %895
      %v897 = vsel %vm515, %v894, %v896
      %v898 = vsel %vm515, %v892, %v894
      %v899 = vsel %vm515, %v890, %v892
      %v900 = vsel %vm515, %v896, %v890
      %v901 = vsel %vm532, %v899, 0.0
      %v902 = vsel %vm533, %v898, 0.0
      %v903 = vsel %vm534, %v897, 0.0
      %v904 = vsel %vm535, %v900, 0.0
      %905 = vst [vmem:[#allocation2 + $0xc0] sm:$0xff] %v901
      %906 = vst [vmem:[#allocation2 + $0xc8] sm:$0xff] %v902
      %907 = vst [vmem:[#allocation2 + $0xd0] sm:$0xff] %v903
      %908 = vst [vmem:[#allocation2 + $0xd8] sm:$0xff] %v904
      %909 = vrot.lane.b32.xlu0 %v780, 112
      %v910 = vpop.permute.xlu0 %909
      %911 = vrot.lane.b32.xlu0 %v781, 112
      %v912 = vpop.permute.xlu0 %911
      %913 = vrot.lane.b32.xlu0 %v782, 112
      %v914 = vpop.permute.xlu0 %913
      %915 = vrot.lane.b32.xlu0 %v783, 112
      %v916 = vpop.permute.xlu0 %915
      %v917 = vsel %vm552, %v914, %v916
      %v918 = vsel %vm552, %v912, %v914
      %v919 = vsel %vm552, %v910, %v912
      %v920 = vsel %vm552, %v916, %v910
      %v921 = vsel %vm561, %v919, 0.0
      %v922 = vsel %vm562, %v918, 0.0
      %v923 = vsel %vm563, %v917, 0.0
      %v924 = vsel %vm564, %v920, 0.0
      %925 = vst [vmem:[#allocation2 + $0xe0] sm:$0xff] %v921
      %926 = vst [vmem:[#allocation2 + $0xe8] sm:$0xff] %v922
      %927 = vst [vmem:[#allocation2 + $0xf0] sm:$0xff] %v923
      %928 = vst [vmem:[#allocation2 + $0xf8] sm:$0xff] %v924
      %929 = vrot.lane.b32.xlu0 %v780, 111
      %v930 = vpop.permute.xlu0 %929
      %931 = vrot.lane.b32.xlu0 %v781, 111
      %v932 = vpop.permute.xlu0 %931
      %933 = vrot.lane.b32.xlu0 %v782, 111
      %v934 = vpop.permute.xlu0 %933
      %935 = vrot.lane.b32.xlu0 %v783, 111
      %v936 = vpop.permute.xlu0 %935
      %v937 = vsel %vm581, %v934, %v936
      %v938 = vsel %vm581, %v932, %v934
      %v939 = vsel %vm581, %v930, %v932
      %v940 = vsel %vm581, %v936, %v930
      %v941 = vsel %vm594, %v939, 0.0
      %v942 = vsel %vm595, %v938, 0.0
      %v943 = vsel %vm596, %v937, 0.0
      %v944 = vsel %vm597, %v940, 0.0
      %945 = vst [vmem:[#allocation2 + $0x100] sm:$0xff] %v941
      %946 = vst [vmem:[#allocation2 + $0x108] sm:$0xff] %v942
      %947 = vst [vmem:[#allocation2 + $0x110] sm:$0xff] %v943
      %948 = vst [vmem:[#allocation2 + $0x118] sm:$0xff] %v944
      %v949 = vld [vmem:[#allocation2] sm:$0xff]
      %v950 = vld [vmem:[#allocation2 + $0x8] sm:$0xff]
      %v951 = vld [vmem:[#allocation2 + $0x10] sm:$0xff]
      %v952 = vld [vmem:[#allocation2 + $0x18] sm:$0xff]
      %v953 = vld [vmem:[#allocation2 + $0x20] sm:$0xff]
      %v954 = vld [vmem:[#allocation2 + $0x28] sm:$0xff]
      %v955 = vld [vmem:[#allocation2 + $0x30] sm:$0xff]
      %v956 = vld [vmem:[#allocation2 + $0x38] sm:$0xff]
      %v957 = vld [vmem:[#allocation2 + $0x40] sm:$0xff]
      %v958 = vld [vmem:[#allocation2 + $0x48] sm:$0xff]
      %v959 = vld [vmem:[#allocation2 + $0x50] sm:$0xff]
      %v960 = vld [vmem:[#allocation2 + $0x58] sm:$0xff]
      %v961 = vld [vmem:[#allocation2 + $0x60] sm:$0xff]
      %v962 = vld [vmem:[#allocation2 + $0x68] sm:$0xff]
      %v963 = vld [vmem:[#allocation2 + $0x70] sm:$0xff]
      %v964 = vld [vmem:[#allocation2 + $0x78] sm:$0xff]
      %v965 = vld [vmem:[#allocation2 + $0x80] sm:$0xff]
      %v966 = vld [vmem:[#allocation2 + $0x88] sm:$0xff]
      %v967 = vld [vmem:[#allocation2 + $0x90] sm:$0xff]
      %v968 = vld [vmem:[#allocation2 + $0x98] sm:$0xff]
      %v969 = vld [vmem:[#allocation2 + $0xa0] sm:$0xff]
      %v970 = vld [vmem:[#allocation2 + $0xa8] sm:$0xff]
      %v971 = vld [vmem:[#allocation2 + $0xb0] sm:$0xff]
      %v972 = vld [vmem:[#allocation2 + $0xb8] sm:$0xff]
      %v973 = vld [vmem:[#allocation2 + $0xc0] sm:$0xff]
      %v974 = vld [vmem:[#allocation2 + $0xc8] sm:$0xff]
      %v975 = vld [vmem:[#allocation2 + $0xd0] sm:$0xff]
      %v976 = vld [vmem:[#allocation2 + $0xd8] sm:$0xff]
      %v977 = vld [vmem:[#allocation2 + $0xe0] sm:$0xff]
      %v978 = vld [vmem:[#allocation2 + $0xe8] sm:$0xff]
      %v979 = vld [vmem:[#allocation2 + $0xf0] sm:$0xff]
      %v980 = vld [vmem:[#allocation2 + $0xf8] sm:$0xff]
      %v981 = vld [vmem:[#allocation2 + $0x100] sm:$0xff]
      %v982 = vld [vmem:[#allocation2 + $0x108] sm:$0xff]
      %v983 = vld [vmem:[#allocation2 + $0x110] sm:$0xff]
      %v984 = vld [vmem:[#allocation2 + $0x118] sm:$0xff]
      %v985 = vpack.c.bf16 %v953, %v949
      %v986 = vpack.c.bf16 %v954, %v950
      %v987 = vpack.c.bf16 %v955, %v951
      %v988 = vpack.c.bf16 %v956, %v952
      %v989 = vpack.c.bf16 %v961, %v957
      %v990 = vpack.c.bf16 %v962, %v958
      %v991 = vpack.c.bf16 %v963, %v959
      %v992 = vpack.c.bf16 %v964, %v960
      %v993 = vpack.c.bf16 %v969, %v965
      %v994 = vpack.c.bf16 %v970, %v966
      %v995 = vpack.c.bf16 %v971, %v967
      %v996 = vpack.c.bf16 %v972, %v968
      %v997 = vpack.c.bf16 %v977, %v973
      %v998 = vpack.c.bf16 %v978, %v974
      %v999 = vpack.c.bf16 %v979, %v975
      %v1000 = vpack.c.bf16 %v980, %v976
      %v1001 = vpack.c.bf16 %v981, %v981
      %v1002 = vpack.c.bf16 %v982, %v982
      %v1003 = vpack.c.bf16 %v983, %v983
      %v1004 = vpack.c.bf16 %v984, %v984
      %v1006 = vsel %vm667, %v784, 0
      %v1009 = vsel %vm671, %v1001, 0
      %v1012 = vsel %vm671, %v1002, 0
      %v1015 = vsel %vm671, %v1003, 0
      %v1018 = vsel %vm671, %v1004, 0
      %1020 = vmatpush.bf16.msra.mxu0 0
      %1021 = vmatpush.bf16.msra.mxu0 0
      %1022 = vmatpush.bf16.msra.mxu0 0
      %1023 = vmatpush.bf16.msra.mxu0 %v1009
      %1024 = vmatpush.bf16.msra.mxu0 %v997
      %1025 = vmatpush.bf16.msra.mxu0 %v993
      %1026 = vmatpush.bf16.msra.mxu0 %v989
      %1027 = vmatpush.bf16.msra.mxu0 %v985
      %1028 = vmatmul.bf16.gmra.mxu0 %v1006
      %v1029 = vpop.f32.mrf.mxu0
      %v1030 = vadd.f32 0.0, %v1029
      %v1031 = vpop.f32.mrf.mxu0
      %1032 = vdwg.mxu0
      %1033 = vmatpush.bf16.msra.mxu0 0
      %1034 = vmatpush.bf16.msra.mxu0 0
      %1035 = vmatpush.bf16.msra.mxu0 0
      %1036 = vmatpush.bf16.msra.mxu0 %v1012
      %1037 = vmatpush.bf16.msra.mxu0 %v998
      %1038 = vmatpush.bf16.msra.mxu0 %v994
      %1039 = vmatpush.bf16.msra.mxu0 %v990
      %1040 = vmatpush.bf16.msra.mxu0 %v986
      %1041 = vmatmul.bf16.gmra.mxu0 %v1006
      %v1042 = vpop.f32.mrf.mxu0
      %v1043 = vadd.f32 0.0, %v1042
      %v1044 = vpop.f32.mrf.mxu0
      %1045 = vdwg.mxu0
      %1046 = vmatpush.bf16.msra.mxu0 0
      %1047 = vmatpush.bf16.msra.mxu0 0
      %1048 = vmatpush.bf16.msra.mxu0 0
      %1049 = vmatpush.bf16.msra.mxu0 %v1015
      %1050 = vmatpush.bf16.msra.mxu0 %v999
      %1051 = vmatpush.bf16.msra.mxu0 %v995
      %1052 = vmatpush.bf16.msra.mxu0 %v991
      %1053 = vmatpush.bf16.msra.mxu0 %v987
      %1054 = vmatmul.bf16.gmra.mxu0 %v1006
      %v1055 = vpop.f32.mrf.mxu0
      %v1056 = vadd.f32 0.0, %v1055
      %v1057 = vpop.f32.mrf.mxu0
      %1058 = vdwg.mxu0
      %1059 = vmatpush.bf16.msra.mxu0 0
      %1060 = vmatpush.bf16.msra.mxu0 0
      %1061 = vmatpush.bf16.msra.mxu0 0
      %1062 = vmatpush.bf16.msra.mxu0 %v1018
      %1063 = vmatpush.bf16.msra.mxu0 %v1000
      %1064 = vmatpush.bf16.msra.mxu0 %v996
      %1065 = vmatpush.bf16.msra.mxu0 %v992
      %1066 = vmatpush.bf16.msra.mxu0 %v988
      %1067 = vmatmul.bf16.gmra.mxu0 %v1006
      %v1068 = vpop.f32.mrf.mxu0
      %v1069 = vadd.f32 0.0, %v1068
      %v1070 = vpop.f32.mrf.mxu0
      %1071 = vdwg.mxu0
      %v1072 = vld [vmem:[%s5] sm:$0xff]
      %1074 = vset.pattern.permute.xlu0 0
      %1075 = vperm.xlu0 %1074, %v1072
      %v1076 = vpop.permute.xlu0 %1075
      %v1078 = vmul.f32 %v1030, %v1076
      %v1079 = vmul.f32 %v1043, %v1076
      %v1080 = vmul.f32 %v1056, %v1076
      %v1081 = vmul.f32 %v1069, %v1076
      %v1082 = vld [vmem:[%s6] sm:$0xff]
      %1084 = vset.pattern.permute.xlu0 0
      %1085 = vperm.xlu0 %1084, %v1082
      %v1086 = vpop.permute.xlu0 %1085
      %v1088 = vadd.f32 %v1078, %v1086
      %v1089 = vadd.f32 %v1079, %v1086
      %v1090 = vadd.f32 %v1080, %v1086
      %v1091 = vadd.f32 %v1081, %v1086
      %v1092 = vadd.f32 %v1088, %v776
      %v1093 = vadd.f32 %v1089, %v777
      %v1094 = vadd.f32 %v1090, %v778
      %v1095 = vadd.f32 %v1091, %v779
      %v1096 = vmax.f32 %v1092, 0.0
      %v1097 = vmax.f32 %v1093, 0.0
      %v1098 = vmax.f32 %v1094, 0.0
      %v1099 = vmax.f32 %v1095, 0.0
      %1100 = vrot.lane.b32.xlu0 %v1096, 127
      %v1101 = vpop.permute.xlu0 %1100
      %1102 = vrot.lane.b32.xlu0 %v1097, 127
      %v1103 = vpop.permute.xlu0 %1102
      %1104 = vrot.lane.b32.xlu0 %v1098, 127
      %v1105 = vpop.permute.xlu0 %1104
      %1106 = vrot.lane.b32.xlu0 %v1099, 127
      %v1107 = vpop.permute.xlu0 %1106
      %v1108 = vsel %vm486, %v1105, %v1107
      %v1109 = vsel %vm486, %v1103, %v1105
      %v1110 = vsel %vm486, %v1101, %v1103
      %v1111 = vsel %vm486, %v1107, %v1101
      %v1112 = vmax.f32 %v1096, %v1110
      %v1113 = vmax.f32 %v1097, %v1109
      %v1114 = vmax.f32 %v1098, %v1108
      %v1115 = vmax.f32 %v1099, %v1111
      %1116 = vrot.lane.b32.xlu0 %v1096, 112
      %v1117 = vpop.permute.xlu0 %1116
      %1118 = vrot.lane.b32.xlu0 %v1097, 112
      %v1119 = vpop.permute.xlu0 %1118
      %1120 = vrot.lane.b32.xlu0 %v1098, 112
      %v1121 = vpop.permute.xlu0 %1120
      %1122 = vrot.lane.b32.xlu0 %v1099, 112
      %v1123 = vpop.permute.xlu0 %1122
      %v1124 = vsel %vm552, %v1121, %v1123
      %v1125 = vsel %vm552, %v1119, %v1121
      %v1126 = vsel %vm552, %v1117, %v1119
      %v1127 = vsel %vm552, %v1123, %v1117
      %v1128 = vmax.f32 %v1112, %v1126
      %v1129 = vmax.f32 %v1113, %v1125
      %v1130 = vmax.f32 %v1114, %v1124
      %v1131 = vmax.f32 %v1115, %v1127
      %1132 = vrot.lane.b32.xlu0 %v1096, 111
      %v1133 = vpop.permute.xlu0 %1132
      %1134 = vrot.lane.b32.xlu0 %v1097, 111
      %v1135 = vpop.permute.xlu0 %1134
      %1136 = vrot.lane.b32.xlu0 %v1098, 111
      %v1137 = vpop.permute.xlu0 %1136
      %1138 = vrot.lane.b32.xlu0 %v1099, 111
      %v1139 = vpop.permute.xlu0 %1138
      %v1140 = vsel %vm581, %v1137, %v1139
      %v1141 = vsel %vm581, %v1135, %v1137
      %v1142 = vsel %vm581, %v1133, %v1135
      %v1143 = vsel %vm581, %v1139, %v1133
      %v1144 = vmax.f32 %v1128, %v1142
      %v1145 = vmax.f32 %v1129, %v1141
      %v1146 = vmax.f32 %v1130, %v1140
      %v1147 = vmax.f32 %v1131, %v1143
      %1148 = vst [vmem:[%s280] sm:$0xff] %v1144
      %1149 = vst [vmem:[%s280 + $0x8] sm:$0xff] %v1145
      %1150 = vst [vmem:[%s280 + $0x10] sm:$0xff] %v1146
      %1151 = vst [vmem:[%s280 + $0x18] sm:$0xff] %v1147
      %s1152 = smul.u32 4, %s18
      %p1153 = scmp.lt.s32.totalorder %s1152, 7
      %s1154 = scalar_select %p1153, %s1152, 7
      %s1155 = smul.addr %s1154, 8
      %s1156 = scalar_lea.vmem %s7, %s1155
      // Predicated region
      $region49: #{basic_block_forward.1} parent=47 // pred_check
        %p1157 = pneg %p188
      $region50: #{basic_block_forward.1} parent=47 // pred_check_branch
        %1159 = sbr.rel (%p1157) target = $region52
      $region51: #{basic_block_forward.1} parent=47 // pred_region
        %s1160 = smul.u32 4, %s18
      $region52: #{basic_block_forward.1} parent=47 // pred_fallthru
        _
    $region48: #{basic_block_forward.1} parent=5 // pred_fallthru
      _
    %p1161 = scmp.le.s32.totalorder 2, %s13
    // Predicated region
    $region53: #{basic_block_forward.1} parent=5 // pred_check
      %p1162 = pneg %p1161
    $region54: #{basic_block_forward.1} parent=5 // pred_check_branch
      %1164 = sbr.rel (%p1162) target = $region56
    $region55: #{basic_block_forward.1} parent=5 // pred_region
      %s1165 = ssub.s32 %s13, 2
      // Predicated region
      $region57: #{basic_block_forward.1} parent=55 // pred_check
        %p1166 = pneg %p194
      $region58: #{basic_block_forward.1} parent=55 // pred_check_branch
        %1168 = sbr.rel (%p1166) target = $region60
      $region59: #{basic_block_forward.1} parent=55 // pred_region
        %s1169 = smul.u32 4, %s19
        %p1170 = scmp.lt.s32.totalorder %s1169, 7
        %s1171 = scalar_select %p1170, %s1169, 7
        %s1172 = smul.addr %s1171, 8
        %s1173 = scalar_lea.vmem %s7, %s1172
      $region60: #{basic_block_forward.1} parent=55 // pred_fallthru
        _
    $region56: #{basic_block_forward.1} parent=5 // pred_fallthru
      _
  $region6: #{basic_block_forward.1} parent=0 // loop_footer
    %s17 = sadd.s32 1, %s13
  $region7: #{basic_block_forward.1} parent=0 // loop_footer_branch
    %12 = sbr.rel target = $region3
  $region8: #{basic_block_forward.1} parent=0 // loop_exit
    _

</llo_original>
